<compile_context>
chip_gen: v7x
topology: tpu7x:2x2x1
jax: 0.10.0
libtpu: 0.0.40
codegen_flags: <defaults>
</compile_context>

<pallas_src>
import jax
import jax.numpy as jnp
import numpy as np
from jax.experimental import pallas as pl
from jax.experimental.pallas import tpu as pltpu

LATENT_DIM = 32
NEG_SLOPE = 0.01  # nn.LeakyReLU default negative_slope


# --------------------------- fused decoder kernel ---------------------------
def decoder_kernel(z_ref, wt_ref, blin_ref, cmask_ref, sel_ref,
                   w1_ref, b1_ref, w2_ref, b2_ref, w3_ref, b3_ref, o_ref):
    bt = z_ref.shape[0]          # batch-tile size
    W = bt * 128                 # batch stacked along lanes

    # ---- Linear(latent, 384): one matmul for the whole batch tile ----
    hlin = jnp.dot(z_ref[...], wt_ref[...],
                   preferred_element_type=jnp.float32) + blin_ref[...]     # (bt,384)

    # ---- Reshape(16,24) + nearest-Upsample(126) + zero-pad(3) for conv1 ----
    # per sample: channel-masked sublane-broadcast of the 384-row, then one 0/1
    # selection matmul that drops the values at columns 3..128 of a (16,256) slab
    cmask = cmask_ref[...]
    sel = sel_ref[...]
    x0p = []
    for b in range(bt):
        row = jnp.broadcast_to(hlin[b:b + 1, :], (16, 384)) * cmask
        x0p.append(jnp.dot(row, sel, preferred_element_type=jnp.float32))  # (16,256)

    # ---- ConvTranspose1d(16,16,K=5,pad=1): im2col -> one (16,80)@(80,W) dot ----
    x1col = jnp.concatenate(
        [jnp.concatenate([x0p[b][:, k:k + 128] for b in range(bt)], axis=1)
         for k in range(5)], axis=0)                                       # (80, W)
    y1 = jnp.dot(w1_ref[...], x1col,
                 preferred_element_type=jnp.float32) + b1_ref[...]         # (16, W)
    y1 = jnp.where(y1 > 0, y1, NEG_SLOPE * y1)                             # LeakyReLU

    # per-sample edge masks: zero the column that wraps across each 128-lane slot
    col = jax.lax.broadcasted_iota(jnp.int32, (16, W), 1) % 128
    mask_lo = col != 0
    mask_hi = col != 127

    def conv_k3(x, w_ref, b_ref):
        # taps: k=0 -> x[i-1] (zero at local col 0), k=1 -> x, k=2 -> x[i+1]
        xr = jnp.where(mask_lo, jnp.roll(x, 1, axis=1), 0.0)
        xl = jnp.where(mask_hi, jnp.roll(x, -1, axis=1), 0.0)
        xcol = jnp.concatenate([xr, x, xl], axis=0)                        # (48, W)
        return jnp.dot(w_ref[...], xcol,
                       preferred_element_type=jnp.float32) + b_ref[...]

    # ---- ConvTranspose1d(16,16,K=3,pad=1) + LeakyReLU ----
    y2 = conv_k3(y1, w2_ref, b2_ref)                                       # (16, W)
    y2 = jnp.where(y2 > 0, y2, NEG_SLOPE * y2)

    # ---- ConvTranspose1d(16,6,K=3,pad=1) ----
    y3 = conv_k3(y2, w3_ref, b3_ref)                                       # (6, W)

    # un-stack the batch from the lane axis into the (bt, 6, 128) output block
    for b in range(bt):
        o_ref[b] = y3[:, b * 128:(b + 1) * 128]


# --------------------------- trace-time constants ---------------------------
def _build_constants():
    # nearest upsample 24 -> 126: src = floor(i * 24 / 126)
    idx = (np.arange(126) * 24) // 126
    # row c keeps only lanes [c*24, (c+1)*24) of the 384-vector
    cmask = np.zeros((16, 384), np.float32)
    for c in range(16):
        cmask[c, c * 24:(c + 1) * 24] = 1.0
    # selection matrix: upsample-gather + place at columns 3..128 (zero-padded
    # by K-1-p = 3 on each side for the first transposed conv), 256-lane aligned
    sel = np.zeros((384, 256), np.float32)
    for j in range(126):
        sel[np.arange(16) * 24 + idx[j], j + 3] = 1.0
    return jnp.asarray(cmask), jnp.asarray(sel)


def _conv_col_weight(w):
    # w: (Cin, Cout, K) = PyTorch ConvTranspose1d layout.
    # convT(stride=1,pad=p) == sum_k Wflip_k @ slice_k(zero-pad(x, K-1-p));
    # combine the K taps into a single (Cout, K*Cin) im2col weight.
    cin, cout, K = w.shape
    wk = jnp.flip(w, axis=2).transpose(2, 1, 0)        # (K, Cout, Cin)
    return wk.transpose(1, 0, 2).reshape(cout, K * cin)


# ------------------------------- full forward -------------------------------
def decoder_forward(z, params):
    B, D = z.shape
    bt = B if B <= 8 else 8          # batch tile (demo B=2 -> one grid step)
    n_tiles = pl.cdiv(B, bt)
    W = bt * 128

    cmask, sel = _build_constants()
    wt = params["w_lin"].T                                   # (D, 384)
    b_row = params["b_lin"][None, :]                         # (1, 384)
    w1 = _conv_col_weight(params["w_c1"])                    # (16, 80)
    w2 = _conv_col_weight(params["w_c2"])                    # (16, 48)
    w3 = _conv_col_weight(params["w_c3"])                    # (6, 48)
    b1 = jnp.broadcast_to(params["b_c1"][:, None], (16, W))
    b2 = jnp.broadcast_to(params["b_c2"][:, None], (16, W))
    b3 = jnp.broadcast_to(params["b_c3"][:, None], (6, W))

    def fixed(*shape):
        return pl.BlockSpec(shape, lambda g: (0,) * len(shape))

    return pl.pallas_call(
        decoder_kernel,
        out_shape=jax.ShapeDtypeStruct((B, 6, 128), jnp.float32),
        grid=(n_tiles,),
        in_specs=[
            pl.BlockSpec((bt, D), lambda g: (g, 0)),         # z
            fixed(D, 384), fixed(1, 384),                    # linear weight / bias
            fixed(16, 384), fixed(384, 256),                 # channel mask / selection
            fixed(16, 80), fixed(16, W),                     # conv1 weight / bias
            fixed(16, 48), fixed(16, W),                     # conv2 weight / bias
            fixed(6, 48), fixed(6, W),                       # conv3 weight / bias
        ],
        out_specs=pl.BlockSpec((bt, 6, 128), lambda g: (g, 0, 0)),
        compiler_params=pltpu.CompilerParams(
            dimension_semantics=("parallel",)),
    )(z, wt, b_row, cmask, sel, w1, b1, w2, b2, w3, b3)


# ---------------- parameters (deterministic synthetic init) ----------------
def init_params(key, latent_dim):
    ks = jax.random.split(key, 8)
    return dict(
        w_lin=0.1 * jax.random.normal(ks[0], (384, latent_dim), jnp.float32),
        b_lin=0.1 * jax.random.normal(ks[1], (384,), jnp.float32),
        w_c1=0.1 * jax.random.normal(ks[2], (16, 16, 5), jnp.float32),  # (Cin,Cout,K)
        b_c1=0.1 * jax.random.normal(ks[3], (16,), jnp.float32),
        w_c2=0.1 * jax.random.normal(ks[4], (16, 16, 3), jnp.float32),
        b_c2=0.1 * jax.random.normal(ks[5], (16,), jnp.float32),
        w_c3=0.1 * jax.random.normal(ks[6], (16, 6, 3), jnp.float32),
        b_c3=0.1 * jax.random.normal(ks[7], (6,), jnp.float32),
    )


# ---------------- pure-JAX reference (f32, for correctness check) ----------------
def ref_forward(z, params):
    HI = jax.lax.Precision.HIGHEST
    h = jnp.dot(z, params["w_lin"].T, precision=HI) + params["b_lin"]
    h = h.reshape(-1, 16, 24)
    idx = (jnp.arange(126) * 24) // 126
    x = h[:, :, idx]                                   # nearest upsample to 126

    def convT(x, w, b, p):
        K = w.shape[2]
        wc = jnp.flip(w, axis=2).transpose(1, 0, 2)    # (Cout, Cin, K)
        y = jax.lax.conv_general_dilated(
            x, wc, window_strides=(1,), padding=[(K - 1 - p, K - 1 - p)],
            dimension_numbers=("NCH", "OIH", "NCH"), precision=HI)
        return y + b[None, :, None]

    x = convT(x, params["w_c1"], params["b_c1"], 1)
    x = jnp.where(x > 0, x, NEG_SLOPE * x)
    x = convT(x, params["w_c2"], params["b_c2"], 1)
    x = jnp.where(x > 0, x, NEG_SLOPE * x)
    x = convT(x, params["w_c3"], params["b_c3"], 1)
    return x


if __name__ == "__main__":
    key = jax.random.PRNGKey(0)
    kz, kp = jax.random.split(key)
    params = init_params(kp, LATENT_DIM)
    z = jax.random.normal(kz, (2, LATENT_DIM), jnp.float32)   # batch=2, latent=32

    out = jax.jit(decoder_forward)(z, params)
    out = jax.block_until_ready(out)
    assert out.shape == (2, 6, 128), out.shape

    ref = ref_forward(z, params)
    # kernel matmuls run at default (single-pass bf16) MXU precision; compare
    # against the f32 HIGHEST-precision reference with a bf16-aware tolerance.
    np.testing.assert_allclose(np.asarray(out), np.asarray(ref),
                               rtol=2e-2, atol=2e-2)
    print("KERNEL_OK")
</pallas_src>

<mosaic_0001>
module attributes {stable_mosaic.version = 11 : i64} {
  func.func @decoder_kernel(%arg0: i32, %arg1: memref<2x32xf32, #tpu.memory_space<vmem>>, %arg2: memref<32x384xf32, #tpu.memory_space<vmem>>, %arg3: memref<1x384xf32, #tpu.memory_space<vmem>>, %arg4: memref<16x384xf32, #tpu.memory_space<vmem>>, %arg5: memref<384x256xf32, #tpu.memory_space<vmem>>, %arg6: memref<16x80xf32, #tpu.memory_space<vmem>>, %arg7: memref<16x256xf32, #tpu.memory_space<vmem>>, %arg8: memref<16x48xf32, #tpu.memory_space<vmem>>, %arg9: memref<16x256xf32, #tpu.memory_space<vmem>>, %arg10: memref<6x48xf32, #tpu.memory_space<vmem>>, %arg11: memref<6x256xf32, #tpu.memory_space<vmem>>, %arg12: memref<2x6x128xf32, #tpu.memory_space<vmem>>) attributes {dimension_semantics = [#tpu.dimension_semantics<parallel>], iteration_bounds = array<i64: 1>, scalar_prefetch = 0 : i64, scratch_operands = 0 : i64, tpu.core_type = #tpu.core_type<tc>, window_params = [{transform_indices = @transform_0, window_bounds = array<i64: 2, 32>}, {pipeline_mode = #tpu.pipeline_mode<synchronous>, transform_indices = @transform_1, window_bounds = array<i64: 32, 384>}, {pipeline_mode = #tpu.pipeline_mode<synchronous>, transform_indices = @transform_2, window_bounds = array<i64: 1, 384>}, {pipeline_mode = #tpu.pipeline_mode<synchronous>, transform_indices = @transform_3, window_bounds = array<i64: 16, 384>}, {pipeline_mode = #tpu.pipeline_mode<synchronous>, transform_indices = @transform_4, window_bounds = array<i64: 384, 256>}, {pipeline_mode = #tpu.pipeline_mode<synchronous>, transform_indices = @transform_5, window_bounds = array<i64: 16, 80>}, {pipeline_mode = #tpu.pipeline_mode<synchronous>, transform_indices = @transform_6, window_bounds = array<i64: 16, 256>}, {pipeline_mode = #tpu.pipeline_mode<synchronous>, transform_indices = @transform_7, window_bounds = array<i64: 16, 48>}, {pipeline_mode = #tpu.pipeline_mode<synchronous>, transform_indices = @transform_8, window_bounds = array<i64: 16, 256>}, {pipeline_mode = #tpu.pipeline_mode<synchronous>, transform_indices = @transform_9, window_bounds = array<i64: 6, 48>}, {pipeline_mode = #tpu.pipeline_mode<synchronous>, transform_indices = @transform_10, window_bounds = array<i64: 6, 256>}, {transform_indices = @transform_11, window_bounds = array<i64: 2, 6, 128>}]} {
    %c0 = arith.constant 0 : index
    %c0_0 = arith.constant 0 : index
    %0 = vector.load %arg1[%c0, %c0_0] : memref<2x32xf32, #tpu.memory_space<vmem>>, vector<2x32xf32>
    %c0_1 = arith.constant 0 : index
    %c0_2 = arith.constant 0 : index
    %1 = vector.load %arg2[%c0_1, %c0_2] : memref<32x384xf32, #tpu.memory_space<vmem>>, vector<32x384xf32>
    %cst = arith.constant dense<0.000000e+00> : vector<2x384xf32>
    %2 = tpu.matmul %0, %1, %cst {dimension_numbers = #tpu.dot_dimension_numbers<[1], [0], [0], [1], [0, 0, 1, 1], [], []>} : vector<2x32xf32>, vector<32x384xf32>, vector<2x384xf32> -> vector<2x384xf32>
    %c0_3 = arith.constant 0 : index
    %c0_4 = arith.constant 0 : index
    %3 = vector.load %arg3[%c0_3, %c0_4] : memref<1x384xf32, #tpu.memory_space<vmem>>, vector<1x384xf32>
    %4 = vector.broadcast %3 : vector<1x384xf32> to vector<2x384xf32>
    %5 = arith.addf %2, %4 : vector<2x384xf32>
    %c0_5 = arith.constant 0 : index
    %c0_6 = arith.constant 0 : index
    %6 = vector.load %arg4[%c0_5, %c0_6] : memref<16x384xf32, #tpu.memory_space<vmem>>, vector<16x384xf32>
    %c0_7 = arith.constant 0 : index
    %c0_8 = arith.constant 0 : index
    %7 = vector.load %arg5[%c0_7, %c0_8] : memref<384x256xf32, #tpu.memory_space<vmem>>, vector<384x256xf32>
    %8 = vector.extract_strided_slice %5 {offsets = [0, 0], sizes = [1, 384], strides = [1, 1]} : vector<2x384xf32> to vector<1x384xf32>
    %9 = vector.shape_cast %8 : vector<1x384xf32> to vector<1x384xf32>
    %10 = vector.broadcast %9 : vector<1x384xf32> to vector<16x384xf32>
    %11 = arith.mulf %10, %6 : vector<16x384xf32>
    %cst_9 = arith.constant dense<0.000000e+00> : vector<16x256xf32>
    %12 = tpu.matmul %11, %7, %cst_9 {dimension_numbers = #tpu.dot_dimension_numbers<[1], [0], [0], [1], [0, 0, 1, 1], [], []>} : vector<16x384xf32>, vector<384x256xf32>, vector<16x256xf32> -> vector<16x256xf32>
    %13 = vector.extract_strided_slice %5 {offsets = [1, 0], sizes = [1, 384], strides = [1, 1]} : vector<2x384xf32> to vector<1x384xf32>
    %14 = vector.shape_cast %13 : vector<1x384xf32> to vector<1x384xf32>
    %15 = vector.broadcast %14 : vector<1x384xf32> to vector<16x384xf32>
    %16 = arith.mulf %15, %6 : vector<16x384xf32>
    %cst_10 = arith.constant dense<0.000000e+00> : vector<16x256xf32>
    %17 = tpu.matmul %16, %7, %cst_10 {dimension_numbers = #tpu.dot_dimension_numbers<[1], [0], [0], [1], [0, 0, 1, 1], [], []>} : vector<16x384xf32>, vector<384x256xf32>, vector<16x256xf32> -> vector<16x256xf32>
    %18 = vector.extract_strided_slice %12 {offsets = [0, 0], sizes = [16, 128], strides = [1, 1]} : vector<16x256xf32> to vector<16x128xf32>
    %19 = vector.extract_strided_slice %17 {offsets = [0, 0], sizes = [16, 128], strides = [1, 1]} : vector<16x256xf32> to vector<16x128xf32>
    %20 = tpu.concatenate %18, %19 in 1 : vector<16x128xf32>, vector<16x128xf32> -> vector<16x256xf32>
    %21 = vector.extract_strided_slice %12 {offsets = [0, 1], sizes = [16, 128], strides = [1, 1]} : vector<16x256xf32> to vector<16x128xf32>
    %22 = vector.extract_strided_slice %17 {offsets = [0, 1], sizes = [16, 128], strides = [1, 1]} : vector<16x256xf32> to vector<16x128xf32>
    %23 = tpu.concatenate %21, %22 in 1 : vector<16x128xf32>, vector<16x128xf32> -> vector<16x256xf32>
    %24 = vector.extract_strided_slice %12 {offsets = [0, 2], sizes = [16, 128], strides = [1, 1]} : vector<16x256xf32> to vector<16x128xf32>
    %25 = vector.extract_strided_slice %17 {offsets = [0, 2], sizes = [16, 128], strides = [1, 1]} : vector<16x256xf32> to vector<16x128xf32>
    %26 = tpu.concatenate %24, %25 in 1 : vector<16x128xf32>, vector<16x128xf32> -> vector<16x256xf32>
    %27 = vector.extract_strided_slice %12 {offsets = [0, 3], sizes = [16, 128], strides = [1, 1]} : vector<16x256xf32> to vector<16x128xf32>
    %28 = vector.extract_strided_slice %17 {offsets = [0, 3], sizes = [16, 128], strides = [1, 1]} : vector<16x256xf32> to vector<16x128xf32>
    %29 = tpu.concatenate %27, %28 in 1 : vector<16x128xf32>, vector<16x128xf32> -> vector<16x256xf32>
    %30 = vector.extract_strided_slice %12 {offsets = [0, 4], sizes = [16, 128], strides = [1, 1]} : vector<16x256xf32> to vector<16x128xf32>
    %31 = vector.extract_strided_slice %17 {offsets = [0, 4], sizes = [16, 128], strides = [1, 1]} : vector<16x256xf32> to vector<16x128xf32>
    %32 = tpu.concatenate %30, %31 in 1 : vector<16x128xf32>, vector<16x128xf32> -> vector<16x256xf32>
    %33 = tpu.concatenate %20, %23, %26, %29, %32 in 0 : vector<16x256xf32>, vector<16x256xf32>, vector<16x256xf32>, vector<16x256xf32>, vector<16x256xf32> -> vector<80x256xf32>
    %c0_11 = arith.constant 0 : index
    %c0_12 = arith.constant 0 : index
    %34 = vector.load %arg6[%c0_11, %c0_12] : memref<16x80xf32, #tpu.memory_space<vmem>>, vector<16x80xf32>
    %cst_13 = arith.constant dense<0.000000e+00> : vector<16x256xf32>
    %35 = tpu.matmul %34, %33, %cst_13 {dimension_numbers = #tpu.dot_dimension_numbers<[1], [0], [0], [1], [0, 0, 1, 1], [], []>} : vector<16x80xf32>, vector<80x256xf32>, vector<16x256xf32> -> vector<16x256xf32>
    %c0_14 = arith.constant 0 : index
    %c0_15 = arith.constant 0 : index
    %36 = vector.load %arg7[%c0_14, %c0_15] : memref<16x256xf32, #tpu.memory_space<vmem>>, vector<16x256xf32>
    %37 = arith.addf %35, %36 : vector<16x256xf32>
    %cst_16 = arith.constant 0.000000e+00 : f32
    %38 = vector.broadcast %cst_16 : f32 to vector<16x256xf32>
    %39 = arith.cmpf ogt, %37, %38 : vector<16x256xf32>
    %cst_17 = arith.constant 0.00999999977 : f32
    %40 = vector.broadcast %cst_17 : f32 to vector<16x256xf32>
    %41 = arith.mulf %40, %37 : vector<16x256xf32>
    %42 = arith.select %39, %37, %41 : vector<16x256xi1>, vector<16x256xf32>
    %43 = tpu.iota {dimensions = array<i32: 1>} : vector<16x256xi32>
    %c128_i32 = arith.constant 128 : i32
    %c0_i32 = arith.constant 0 : i32
    %44 = arith.cmpi eq, %c128_i32, %c0_i32 : i32
    %c1_i32 = arith.constant 1 : i32
    %45 = arith.select %44, %c1_i32, %c128_i32 : i32
    %46 = vector.broadcast %45 : i32 to vector<16x256xi32>
    %47 = arith.remsi %43, %46 : vector<16x256xi32>
    %c0_i32_18 = arith.constant 0 : i32
    %48 = vector.broadcast %c0_i32_18 : i32 to vector<16x256xi32>
    %49 = arith.cmpi ne, %47, %48 : vector<16x256xi32>
    %c0_i32_19 = arith.constant 0 : i32
    %50 = vector.broadcast %c0_i32_19 : i32 to vector<16x256xi32>
    %51 = arith.cmpi slt, %47, %50 : vector<16x256xi32>
    %c0_i32_20 = arith.constant 0 : i32
    %52 = arith.cmpi slt, %45, %c0_i32_20 : i32
    %53 = vector.broadcast %52 : i1 to vector<16x256xi1>
    %54 = vector.broadcast %53 : vector<16x256xi1> to vector<16x256xi1>
    %55 = arith.xori %51, %54 : vector<16x256xi1>
    %56 = arith.andi %55, %49 : vector<16x256xi1>
    %57 = vector.broadcast %45 : i32 to vector<16x256xi32>
    %58 = arith.addi %47, %57 : vector<16x256xi32>
    %59 = arith.select %56, %58, %47 : vector<16x256xi1>, vector<16x256xi32>
    %c0_i32_21 = arith.constant 0 : i32
    %60 = vector.broadcast %c0_i32_21 : i32 to vector<16x256xi32>
    %61 = arith.cmpi ne, %59, %60 : vector<16x256xi32>
    %c127_i32 = arith.constant 127 : i32
    %62 = vector.broadcast %c127_i32 : i32 to vector<16x256xi32>
    %63 = arith.cmpi ne, %59, %62 : vector<16x256xi32>
    %64 = vector.extract_strided_slice %42 {offsets = [0, 255], sizes = [16, 1], strides = [1, 1]} : vector<16x256xf32> to vector<16x1xf32>
    %65 = vector.extract_strided_slice %42 {offsets = [0, 0], sizes = [16, 255], strides = [1, 1]} : vector<16x256xf32> to vector<16x255xf32>
    %66 = tpu.concatenate %64, %65 in 1 : vector<16x1xf32>, vector<16x255xf32> -> vector<16x256xf32>
    %cst_22 = arith.constant 0.000000e+00 : f32
    %67 = vector.broadcast %cst_22 : f32 to vector<16x256xf32>
    %68 = arith.select %61, %66, %67 : vector<16x256xi1>, vector<16x256xf32>
    %69 = vector.extract_strided_slice %42 {offsets = [0, 1], sizes = [16, 255], strides = [1, 1]} : vector<16x256xf32> to vector<16x255xf32>
    %70 = vector.extract_strided_slice %42 {offsets = [0, 0], sizes = [16, 1], strides = [1, 1]} : vector<16x256xf32> to vector<16x1xf32>
    %71 = tpu.concatenate %69, %70 in 1 : vector<16x255xf32>, vector<16x1xf32> -> vector<16x256xf32>
    %cst_23 = arith.constant 0.000000e+00 : f32
    %72 = vector.broadcast %cst_23 : f32 to vector<16x256xf32>
    %73 = arith.select %63, %71, %72 : vector<16x256xi1>, vector<16x256xf32>
    %74 = tpu.concatenate %68, %42, %73 in 0 : vector<16x256xf32>, vector<16x256xf32>, vector<16x256xf32> -> vector<48x256xf32>
    %c0_24 = arith.constant 0 : index
    %c0_25 = arith.constant 0 : index
    %75 = vector.load %arg8[%c0_24, %c0_25] : memref<16x48xf32, #tpu.memory_space<vmem>>, vector<16x48xf32>
    %cst_26 = arith.constant dense<0.000000e+00> : vector<16x256xf32>
    %76 = tpu.matmul %75, %74, %cst_26 {dimension_numbers = #tpu.dot_dimension_numbers<[1], [0], [0], [1], [0, 0, 1, 1], [], []>} : vector<16x48xf32>, vector<48x256xf32>, vector<16x256xf32> -> vector<16x256xf32>
    %c0_27 = arith.constant 0 : index
    %c0_28 = arith.constant 0 : index
    %77 = vector.load %arg9[%c0_27, %c0_28] : memref<16x256xf32, #tpu.memory_space<vmem>>, vector<16x256xf32>
    %78 = arith.addf %76, %77 : vector<16x256xf32>
    %cst_29 = arith.constant 0.000000e+00 : f32
    %79 = vector.broadcast %cst_29 : f32 to vector<16x256xf32>
    %80 = arith.cmpf ogt, %78, %79 : vector<16x256xf32>
    %cst_30 = arith.constant 0.00999999977 : f32
    %81 = vector.broadcast %cst_30 : f32 to vector<16x256xf32>
    %82 = arith.mulf %81, %78 : vector<16x256xf32>
    %83 = arith.select %80, %78, %82 : vector<16x256xi1>, vector<16x256xf32>
    %84 = vector.extract_strided_slice %83 {offsets = [0, 255], sizes = [16, 1], strides = [1, 1]} : vector<16x256xf32> to vector<16x1xf32>
    %85 = vector.extract_strided_slice %83 {offsets = [0, 0], sizes = [16, 255], strides = [1, 1]} : vector<16x256xf32> to vector<16x255xf32>
    %86 = tpu.concatenate %84, %85 in 1 : vector<16x1xf32>, vector<16x255xf32> -> vector<16x256xf32>
    %cst_31 = arith.constant 0.000000e+00 : f32
    %87 = vector.broadcast %cst_31 : f32 to vector<16x256xf32>
    %88 = arith.select %61, %86, %87 : vector<16x256xi1>, vector<16x256xf32>
    %89 = vector.extract_strided_slice %83 {offsets = [0, 1], sizes = [16, 255], strides = [1, 1]} : vector<16x256xf32> to vector<16x255xf32>
    %90 = vector.extract_strided_slice %83 {offsets = [0, 0], sizes = [16, 1], strides = [1, 1]} : vector<16x256xf32> to vector<16x1xf32>
    %91 = tpu.concatenate %89, %90 in 1 : vector<16x255xf32>, vector<16x1xf32> -> vector<16x256xf32>
    %cst_32 = arith.constant 0.000000e+00 : f32
    %92 = vector.broadcast %cst_32 : f32 to vector<16x256xf32>
    %93 = arith.select %63, %91, %92 : vector<16x256xi1>, vector<16x256xf32>
    %94 = tpu.concatenate %88, %83, %93 in 0 : vector<16x256xf32>, vector<16x256xf32>, vector<16x256xf32> -> vector<48x256xf32>
    %c0_33 = arith.constant 0 : index
    %c0_34 = arith.constant 0 : index
    %95 = vector.load %arg10[%c0_33, %c0_34] : memref<6x48xf32, #tpu.memory_space<vmem>>, vector<6x48xf32>
    %cst_35 = arith.constant dense<0.000000e+00> : vector<6x256xf32>
    %96 = tpu.matmul %95, %94, %cst_35 {dimension_numbers = #tpu.dot_dimension_numbers<[1], [0], [0], [1], [0, 0, 1, 1], [], []>} : vector<6x48xf32>, vector<48x256xf32>, vector<6x256xf32> -> vector<6x256xf32>
    %c0_36 = arith.constant 0 : index
    %c0_37 = arith.constant 0 : index
    %97 = vector.load %arg11[%c0_36, %c0_37] : memref<6x256xf32, #tpu.memory_space<vmem>>, vector<6x256xf32>
    %98 = arith.addf %96, %97 : vector<6x256xf32>
    %99 = vector.extract_strided_slice %98 {offsets = [0, 0], sizes = [6, 128], strides = [1, 1]} : vector<6x256xf32> to vector<6x128xf32>
    %c0_38 = arith.constant 0 : index
    %c0_39 = arith.constant 0 : index
    %c0_40 = arith.constant 0 : index
    %100 = vector.load %arg12[%c0_38, %c0_39, %c0_40] : memref<2x6x128xf32, #tpu.memory_space<vmem>>, vector<1x6x128xf32>
    %101 = vector.shape_cast %100 : vector<1x6x128xf32> to vector<6x128xf32>
    %102 = vector.shape_cast %99 : vector<6x128xf32> to vector<1x6x128xf32>
    tpu.vector_store %arg12[%c0_38, %c0_39, %c0_40], %102 {strides = array<i32>} : memref<2x6x128xf32, #tpu.memory_space<vmem>>, vector<1x6x128xf32>,
    %103 = vector.extract_strided_slice %98 {offsets = [0, 128], sizes = [6, 128], strides = [1, 1]} : vector<6x256xf32> to vector<6x128xf32>
    %c1 = arith.constant 1 : index
    %c0_41 = arith.constant 0 : index
    %c0_42 = arith.constant 0 : index
    %104 = vector.load %arg12[%c1, %c0_41, %c0_42] : memref<2x6x128xf32, #tpu.memory_space<vmem>>, vector<1x6x128xf32>
    %105 = vector.shape_cast %104 : vector<1x6x128xf32> to vector<6x128xf32>
    %106 = vector.shape_cast %103 : vector<6x128xf32> to vector<1x6x128xf32>
    tpu.vector_store %arg12[%c1, %c0_41, %c0_42], %106 {strides = array<i32>} : memref<2x6x128xf32, #tpu.memory_space<vmem>>, vector<1x6x128xf32>,
    return
  }
  func.func @transform_0(%arg0: i32) -> (i32, i32) {
    %c0_i32 = arith.constant 0 : i32
    %c0_i32_0 = arith.constant 0 : i32
    return %arg0, %c0_i32 : i32, i32
  }
  func.func @transform_1(%arg0: i32) -> (i32, i32) {
    %c0_i32 = arith.constant 0 : i32
    %c0_i32_0 = arith.constant 0 : i32
    %c0_i32_1 = arith.constant 0 : i32
    return %c0_i32, %c0_i32_0 : i32, i32
  }
  func.func @transform_2(%arg0: i32) -> (i32, i32) {
    %c0_i32 = arith.constant 0 : i32
    %c0_i32_0 = arith.constant 0 : i32
    %c0_i32_1 = arith.constant 0 : i32
    return %c0_i32, %c0_i32_0 : i32, i32
  }
  func.func @transform_3(%arg0: i32) -> (i32, i32) {
    %c0_i32 = arith.constant 0 : i32
    %c0_i32_0 = arith.constant 0 : i32
    %c0_i32_1 = arith.constant 0 : i32
    return %c0_i32, %c0_i32_0 : i32, i32
  }
  func.func @transform_4(%arg0: i32) -> (i32, i32) {
    %c0_i32 = arith.constant 0 : i32
    %c0_i32_0 = arith.constant 0 : i32
    %c0_i32_1 = arith.constant 0 : i32
    return %c0_i32, %c0_i32_0 : i32, i32
  }
  func.func @transform_5(%arg0: i32) -> (i32, i32) {
    %c0_i32 = arith.constant 0 : i32
    %c0_i32_0 = arith.constant 0 : i32
    %c0_i32_1 = arith.constant 0 : i32
    return %c0_i32, %c0_i32_0 : i32, i32
  }
  func.func @transform_6(%arg0: i32) -> (i32, i32) {
    %c0_i32 = arith.constant 0 : i32
    %c0_i32_0 = arith.constant 0 : i32
    %c0_i32_1 = arith.constant 0 : i32
    return %c0_i32, %c0_i32_0 : i32, i32
  }
  func.func @transform_7(%arg0: i32) -> (i32, i32) {
    %c0_i32 = arith.constant 0 : i32
    %c0_i32_0 = arith.constant 0 : i32
    %c0_i32_1 = arith.constant 0 : i32
    return %c0_i32, %c0_i32_0 : i32, i32
  }
  func.func @transform_8(%arg0: i32) -> (i32, i32) {
    %c0_i32 = arith.constant 0 : i32
    %c0_i32_0 = arith.constant 0 : i32
    %c0_i32_1 = arith.constant 0 : i32
    return %c0_i32, %c0_i32_0 : i32, i32
  }
  func.func @transform_9(%arg0: i32) -> (i32, i32) {
    %c0_i32 = arith.constant 0 : i32
    %c0_i32_0 = arith.constant 0 : i32
    %c0_i32_1 = arith.constant 0 : i32
    return %c0_i32, %c0_i32_0 : i32, i32
  }
  func.func @transform_10(%arg0: i32) -> (i32, i32) {
    %c0_i32 = arith.constant 0 : i32
    %c0_i32_0 = arith.constant 0 : i32
    %c0_i32_1 = arith.constant 0 : i32
    return %c0_i32, %c0_i32_0 : i32, i32
  }
  func.func @transform_11(%arg0: i32) -> (i32, i32, i32) {
    %c0_i32 = arith.constant 0 : i32
    %c0_i32_0 = arith.constant 0 : i32
    %c0_i32_1 = arith.constant 0 : i32
    return %arg0, %c0_i32, %c0_i32_0 : i32, i32, i32
  }
}

</mosaic_0001>

<llo_original>
// kernel: decoder_forward.1
$region0: #{decoder_forward.1}
  #allocation0 [shape = 'u32[]', space=smem, size = 0x4, offset = 0x4, fixed_abs, tag = 'smem constant byte address 0x4 - core index']
  #allocation1 [shape = 'u32[144,128]{1,0:T(1,128)}', space=vmem, size = 0x12000, scoped, tag = 'internal scratch']
  %s0 = inlined_call_operand.vmem [shape: f32[2,32], index: 0, kind: input, shape index: {}]
  %s1 = inlined_call_operand.vmem [shape: f32[32,384], index: 1, kind: input, shape index: {}]
  %s2 = inlined_call_operand.vmem [shape: f32[1,384], index: 2, kind: input, shape index: {}]
  %s3 = inlined_call_operand.vmem [shape: f32[16,384], index: 3, kind: input, shape index: {}]
  %s4 = inlined_call_operand.hbm [shape: f32[384,256], index: 4, kind: input, shape index: {}]
  %s5 = inlined_call_operand.vmem [shape: f32[16,80], index: 5, kind: input, shape index: {}]
  %s6 = inlined_call_operand.vmem [shape: f32[16,256], index: 6, kind: input, shape index: {}]
  %s7 = inlined_call_operand.vmem [shape: f32[16,48], index: 7, kind: input, shape index: {}]
  %s8 = inlined_call_operand.vmem [shape: f32[16,256], index: 8, kind: input, shape index: {}]
  %s9 = inlined_call_operand.vmem [shape: f32[6,48], index: 9, kind: input, shape index: {}]
  %s10 = inlined_call_operand.vmem [shape: f32[6,256], index: 10, kind: input, shape index: {}]
  %s11 = inlined_call_operand.vmem [shape: f32[2,6,128], index: 11, kind: output, shape index: {}]
  %s12 = sld [smem:[#allocation0]]
  $region58: #{decoder_forward.1} parent=0
    _
  %s14 = ssub.s32 1, %s12
  %s15 = scalar_select 0, %s14, %s12
  $region1: #{decoder_forward.1} parent=0
    #allocation2 [shape = 'u8[393216]{0}', space=vmem, size = 0x60000, scoped, tag = 'input window, operand 4, single buffered']
    #allocation3 [shape = 's32[1]{0}', space=sflag, size = 0x4, scoped, tag = 'scoped memory for decoder_forward.1']
    %16 = vsyncpa [#allocation3], 0
    // Predicated region
    $region2: #{decoder_forward.1} parent=1 // pred_check
      _
    $region3: #{decoder_forward.1} parent=1 // pred_check_branch
      %18 = sbr.rel (0) target = $region5
    $region4: #{decoder_forward.1} parent=1 // pred_region
      _
    $region5: #{decoder_forward.1} parent=1 // pred_fallthru
      _
    // Predicated region
    $region6: #{decoder_forward.1} parent=1 // pred_check
      _
    $region7: #{decoder_forward.1} parent=1 // pred_check_branch
      %20 = sbr.rel (0) target = $region9
    $region8: #{decoder_forward.1} parent=1 // pred_region
      _
    $region9: #{decoder_forward.1} parent=1 // pred_fallthru
      _
    // Predicated region
    $region10: #{decoder_forward.1} parent=1 // pred_check
      _
    $region11: #{decoder_forward.1} parent=1 // pred_check_branch
      %22 = sbr.rel (0) target = $region13
    $region12: #{decoder_forward.1} parent=1 // pred_region
      _
    $region13: #{decoder_forward.1} parent=1 // pred_fallthru
      _
    // Predicated region
    $region14: #{decoder_forward.1} parent=1 // pred_check
      _
    $region15: #{decoder_forward.1} parent=1 // pred_check_branch
      %24 = sbr.rel (0) target = $region17
    $region16: #{decoder_forward.1} parent=1 // pred_region
      _
    $region17: #{decoder_forward.1} parent=1 // pred_fallthru
      _
    // Predicated region
    $region18: #{decoder_forward.1} parent=1 // pred_check
      _
    $region19: #{decoder_forward.1} parent=1 // pred_check_branch
      %26 = sbr.rel (0) target = $region21
    $region20: #{decoder_forward.1} parent=1 // pred_region
      %s28 = ssub.s32 12288, 12288
      %29 = vsyncadd [#allocation3], %s28
      %s30 = sshll.u32 [#allocation2], 4
      %s31 = int_to_ptr.vmem [resolvable:$true] %s30
      %36 = dma.hbm_to_vmem [thread:$0]  %s4, 12288, %s31, [#allocation3], 256, 256, 16
    $region21: #{decoder_forward.1} parent=1 // pred_fallthru
      _
    // Predicated region
    $region22: #{decoder_forward.1} parent=1 // pred_check
      _
    $region23: #{decoder_forward.1} parent=1 // pred_check_branch
      %38 = sbr.rel (0) target = $region25
    $region24: #{decoder_forward.1} parent=1 // pred_region
      _
    $region25: #{decoder_forward.1} parent=1 // pred_fallthru
      _
    // Predicated region
    $region26: #{decoder_forward.1} parent=1 // pred_check
      _
    $region27: #{decoder_forward.1} parent=1 // pred_check_branch
      %40 = sbr.rel (0) target = $region29
    $region28: #{decoder_forward.1} parent=1 // pred_region
      _
    $region29: #{decoder_forward.1} parent=1 // pred_fallthru
      _
    // Predicated region
    $region30: #{decoder_forward.1} parent=1 // pred_check
      _
    $region31: #{decoder_forward.1} parent=1 // pred_check_branch
      %42 = sbr.rel (0) target = $region33
    $region32: #{decoder_forward.1} parent=1 // pred_region
      _
    $region33: #{decoder_forward.1} parent=1 // pred_fallthru
      _
    // Predicated region
    $region34: #{decoder_forward.1} parent=1 // pred_check
      _
    $region35: #{decoder_forward.1} parent=1 // pred_check_branch
      %44 = sbr.rel (0) target = $region37
    $region36: #{decoder_forward.1} parent=1 // pred_region
      _
    $region37: #{decoder_forward.1} parent=1 // pred_fallthru
      _
    // Predicated region
    $region38: #{decoder_forward.1} parent=1 // pred_check
      _
    $region39: #{decoder_forward.1} parent=1 // pred_check_branch
      %46 = sbr.rel (0) target = $region41
    $region40: #{decoder_forward.1} parent=1 // pred_region
      _
    $region41: #{decoder_forward.1} parent=1 // pred_fallthru
      _
    // Predicated region
    $region42: #{decoder_forward.1} parent=1 // pred_check
      _
    $region43: #{decoder_forward.1} parent=1 // pred_check_branch
      %48 = sbr.rel (0) target = $region45
    $region44: #{decoder_forward.1} parent=1 // pred_region
      _
    $region45: #{decoder_forward.1} parent=1 // pred_fallthru
      _
    // Predicated region
    $region46: #{decoder_forward.1} parent=1 // pred_check
      _
    $region47: #{decoder_forward.1} parent=1 // pred_check_branch
      %50 = sbr.rel (0) target = $region49
    $region48: #{decoder_forward.1} parent=1 // pred_region
      %51 = dma.done [#allocation3], 12288
    $region49: #{decoder_forward.1} parent=1 // pred_fallthru
      _
    %v52 = vld [vmem:[%s0] sm:$0x3]
    %v53 = vld [vmem:[%s1] sm:$0xff]
    %v54 = vld [vmem:[%s1 + $0x8] sm:$0xff]
    %v55 = vld [vmem:[%s1 + $0x10] sm:$0xff]
    %v56 = vld [vmem:[%s1 + $0x18] sm:$0xff]
    %v57 = vld [vmem:[%s1 + $0x20] sm:$0xff]
    %v58 = vld [vmem:[%s1 + $0x28] sm:$0xff]
    %v59 = vld [vmem:[%s1 + $0x30] sm:$0xff]
    %v60 = vld [vmem:[%s1 + $0x38] sm:$0xff]
    %v61 = vld [vmem:[%s1 + $0x40] sm:$0xff]
    %v62 = vld [vmem:[%s1 + $0x48] sm:$0xff]
    %v63 = vld [vmem:[%s1 + $0x50] sm:$0xff]
    %v64 = vld [vmem:[%s1 + $0x58] sm:$0xff]
    %v65 = vld [vmem:[%s2] sm:$0x7]
    %v67 = vlaneseq
    %v68 = vshrl.u32 %v67, 7
    %v69 = vsub.s32 0, %v68
    %v70 = vrot.slane %v65, %v69
    %v71 = vlaneseq
    %v72 = vshrl.u32 %v71, 7
    %v73 = vsub.s32 1, %v72
    %v74 = vrot.slane %v65, %v73
    %v75 = vlaneseq
    %v76 = vshrl.u32 %v75, 7
    %v77 = vsub.s32 2, %v76
    %v78 = vrot.slane %v65, %v77
    %vm82 = vcmask 261120
    %v84 = vsel %vm82, %v52, 0
    %86 = vmatprep.subr.mxu0 %v54
    %87 = vmatpush1.msra.mxu0 %v53
    %88 = vmatprep.subr.mxu0 %v57
    %89 = vmatpush1.msra.mxu0 %v56
    %90 = vmatprep.subr.mxu0 %v60
    %91 = vmatpush1.msra.mxu0 %v59
    %92 = vmatprep.subr.mxu0 %v63
    %93 = vmatpush1.msra.mxu0 %v62
    %94 = vmatprep.subr.mxu0 0.0
    %95 = vmatpush1.msra.mxu0 0.0
    %96 = vmatprep.subr.mxu0 0.0
    %97 = vmatpush1.msra.mxu0 0.0
    %98 = vmatprep.subr.mxu0 0.0
    %99 = vmatpush1.msra.mxu0 0.0
    %100 = vmatprep.subr.mxu0 0.0
    %101 = vmatpush1.msra.mxu0 0.0
    %102 = vmatprep.subr.mxu0 0.0
    %103 = vmatpush1.msra.mxu0 0.0
    %104 = vmatprep.subr.mxu0 0.0
    %105 = vmatpush1.msra.mxu0 0.0
    %106 = vmatprep.subr.mxu0 0.0
    %107 = vmatpush1.msra.mxu0 0.0
    %108 = vmatprep.subr.mxu0 0.0
    %109 = vmatpush1.msra.mxu0 0.0
    %110 = vmatprep.subr.mxu0 0.0
    %111 = vmatpush1.msra.mxu0 0.0
    %112 = vmatprep.subr.mxu0 0.0
    %113 = vmatpush1.msra.mxu0 0.0
    %114 = vmatprep.subr.mxu0 0.0
    %115 = vmatpush1.msra.mxu0 0.0
    %116 = vmatprep.subr.mxu0 0.0
    %117 = vmatpush1.msra.mxu0 0.0
    %118 = vmatprep.subr.mxu0 0.0
    %119 = vmatpush1.msra.mxu0 0.0
    %120 = vmatprep.subr.mxu0 0.0
    %121 = vmatpush1.msra.mxu0 0.0
    %122 = vmatprep.subr.mxu0 0.0
    %123 = vmatpush1.msra.mxu0 0.0
    %124 = vmatprep.subr.mxu0 0.0
    %125 = vmatpush1.msra.mxu0 0.0
    %126 = vmatprep.subr.mxu0 0.0
    %127 = vmatpush1.msra.mxu0 0.0
    %128 = vmatprep.subr.mxu0 0.0
    %129 = vmatpush1.msra.mxu0 0.0
    %130 = vmatprep.subr.mxu0 0.0
    %131 = vmatpush1.msra.mxu0 0.0
    %132 = vmatprep.subr.mxu0 0.0
    %133 = vmatpush1.msra.mxu0 0.0
    %134 = vmatprep.subr.mxu0 0.0
    %135 = vmatpush1.msra.mxu0 0.0
    %136 = vmatprep.subr.mxu0 0.0
    %137 = vmatpush1.msra.mxu0 0.0
    %138 = vmatprep.subr.mxu0 0.0
    %139 = vmatpush1.msra.mxu0 0.0
    %140 = vmatprep.subr.mxu0 0.0
    %141 = vmatpush1.msra.mxu0 0.0
    %142 = vmatprep.subr.mxu0 0.0
    %143 = vmatpush1.msra.mxu0 0.0
    %144 = vmatprep.subr.mxu0 0.0
    %145 = vmatpush1.msra.mxu0 0.0
    %146 = vmatprep.subr.mxu0 0.0
    %147 = vmatpush1.msra.mxu0 0.0
    %148 = vmatprep.subr.mxu0 0.0
    %149 = vmatpush1.msra.mxu0 0.0
    %150 = vmatprep.mubr.f32.mxu0 0.0
    %151 = vmatmul.mubr.f32.gmra.mrb[0].mxu0 %v84
    %v152 = vpop.f32.mrb[0].mxu0
    %v153 = vadd.f32 %v70, %v152
    %v154 = vpop.f32.mrb[0].mxu0
    %v155 = vadd.f32 %v74, %v154
    %156 = vdwg.mxu0
    %157 = vmatprep.subr.mxu0 0.0
    %158 = vmatpush1.msra.mxu0 %v55
    %159 = vmatprep.subr.mxu0 0.0
    %160 = vmatpush1.msra.mxu0 %v58
    %161 = vmatprep.subr.mxu0 0.0
    %162 = vmatpush1.msra.mxu0 %v61
    %163 = vmatprep.subr.mxu0 0.0
    %164 = vmatpush1.msra.mxu0 %v64
    %165 = vmatprep.subr.mxu0 0.0
    %166 = vmatpush1.msra.mxu0 0.0
    %167 = vmatprep.subr.mxu0 0.0
    %168 = vmatpush1.msra.mxu0 0.0
    %169 = vmatprep.subr.mxu0 0.0
    %170 = vmatpush1.msra.mxu0 0.0
    %171 = vmatprep.subr.mxu0 0.0
    %172 = vmatpush1.msra.mxu0 0.0
    %173 = vmatprep.subr.mxu0 0.0
    %174 = vmatpush1.msra.mxu0 0.0
    %175 = vmatprep.subr.mxu0 0.0
    %176 = vmatpush1.msra.mxu0 0.0
    %177 = vmatprep.subr.mxu0 0.0
    %178 = vmatpush1.msra.mxu0 0.0
    %179 = vmatprep.subr.mxu0 0.0
    %180 = vmatpush1.msra.mxu0 0.0
    %181 = vmatprep.subr.mxu0 0.0
    %182 = vmatpush1.msra.mxu0 0.0
    %183 = vmatprep.subr.mxu0 0.0
    %184 = vmatpush1.msra.mxu0 0.0
    %185 = vmatprep.subr.mxu0 0.0
    %186 = vmatpush1.msra.mxu0 0.0
    %187 = vmatprep.subr.mxu0 0.0
    %188 = vmatpush1.msra.mxu0 0.0
    %189 = vmatprep.subr.mxu0 0.0
    %190 = vmatpush1.msra.mxu0 0.0
    %191 = vmatprep.subr.mxu0 0.0
    %192 = vmatpush1.msra.mxu0 0.0
    %193 = vmatprep.subr.mxu0 0.0
    %194 = vmatpush1.msra.mxu0 0.0
    %195 = vmatprep.subr.mxu0 0.0
    %196 = vmatpush1.msra.mxu0 0.0
    %197 = vmatprep.subr.mxu0 0.0
    %198 = vmatpush1.msra.mxu0 0.0
    %199 = vmatprep.subr.mxu0 0.0
    %200 = vmatpush1.msra.mxu0 0.0
    %201 = vmatprep.subr.mxu0 0.0
    %202 = vmatpush1.msra.mxu0 0.0
    %203 = vmatprep.subr.mxu0 0.0
    %204 = vmatpush1.msra.mxu0 0.0
    %205 = vmatprep.subr.mxu0 0.0
    %206 = vmatpush1.msra.mxu0 0.0
    %207 = vmatprep.subr.mxu0 0.0
    %208 = vmatpush1.msra.mxu0 0.0
    %209 = vmatprep.subr.mxu0 0.0
    %210 = vmatpush1.msra.mxu0 0.0
    %211 = vmatprep.subr.mxu0 0.0
    %212 = vmatpush1.msra.mxu0 0.0
    %213 = vmatprep.subr.mxu0 0.0
    %214 = vmatpush1.msra.mxu0 0.0
    %215 = vmatprep.subr.mxu0 0.0
    %216 = vmatpush1.msra.mxu0 0.0
    %217 = vmatprep.subr.mxu0 0.0
    %218 = vmatpush1.msra.mxu0 0.0
    %219 = vmatprep.subr.mxu0 0.0
    %220 = vmatpush1.msra.mxu0 0.0
    %221 = vmatprep.mubr.f32.mxu0 0.0
    %222 = vmatmul.mubr.f32.gmra.mrb[0].mxu0 %v84
    %v223 = vpop.f32.mrb[0].mxu0
    %v224 = vadd.f32 %v78, %v223
    %v225 = vpop.f32.mrb[0].mxu0
    %226 = vdwg.mxu0
    %v227 = vld [vmem:[%s3] sm:$0xff]
    %v228 = vld [vmem:[%s3 + $0x8] sm:$0xff]
    %v229 = vld [vmem:[%s3 + $0x10] sm:$0xff]
    %v230 = vld [vmem:[%s3 + $0x18] sm:$0xff]
    %v231 = vld [vmem:[%s3 + $0x20] sm:$0xff]
    %v232 = vld [vmem:[%s3 + $0x28] sm:$0xff]
    %v233 = vld [vmem:[#allocation2] sm:$0xff]
    %v234 = vld [vmem:[#allocation2 + $0x8] sm:$0xff]
    %v235 = vld [vmem:[#allocation2 + $0x10] sm:$0xff]
    %v236 = vld [vmem:[#allocation2 + $0x18] sm:$0xff]
    %v237 = vld [vmem:[#allocation2 + $0x20] sm:$0xff]
    %v238 = vld [vmem:[#allocation2 + $0x28] sm:$0xff]
    %v239 = vld [vmem:[#allocation2 + $0x30] sm:$0xff]
    %v240 = vld [vmem:[#allocation2 + $0x38] sm:$0xff]
    %v241 = vld [vmem:[#allocation2 + $0x40] sm:$0xff]
    %v242 = vld [vmem:[#allocation2 + $0x48] sm:$0xff]
    %v243 = vld [vmem:[#allocation2 + $0x50] sm:$0xff]
    %v244 = vld [vmem:[#allocation2 + $0x58] sm:$0xff]
    %v245 = vld [vmem:[#allocation2 + $0x60] sm:$0xff]
    %v246 = vld [vmem:[#allocation2 + $0x68] sm:$0xff]
    %v247 = vld [vmem:[#allocation2 + $0x70] sm:$0xff]
    %v248 = vld [vmem:[#allocation2 + $0x78] sm:$0xff]
    %v249 = vld [vmem:[#allocation2 + $0x80] sm:$0xff]
    %v250 = vld [vmem:[#allocation2 + $0x88] sm:$0xff]
    %v251 = vld [vmem:[#allocation2 + $0x90] sm:$0xff]
    %v252 = vld [vmem:[#allocation2 + $0x98] sm:$0xff]
    %v253 = vld [vmem:[#allocation2 + $0xa0] sm:$0xff]
    %v254 = vld [vmem:[#allocation2 + $0xa8] sm:$0xff]
    %v255 = vld [vmem:[#allocation2 + $0xb0] sm:$0xff]
    %v256 = vld [vmem:[#allocation2 + $0xb8] sm:$0xff]
    %v257 = vld [vmem:[#allocation2 + $0xc0] sm:$0xff]
    %v258 = vld [vmem:[#allocation2 + $0xc8] sm:$0xff]
    %v259 = vld [vmem:[#allocation2 + $0xd0] sm:$0xff]
    %v260 = vld [vmem:[#allocation2 + $0xd8] sm:$0xff]
    %v261 = vld [vmem:[#allocation2 + $0xe0] sm:$0xff]
    %v262 = vld [vmem:[#allocation2 + $0xe8] sm:$0xff]
    %v263 = vld [vmem:[#allocation2 + $0xf0] sm:$0xff]
    %v264 = vld [vmem:[#allocation2 + $0xf8] sm:$0xff]
    %v265 = vld [vmem:[#allocation2 + $0x100] sm:$0xff]
    %v266 = vld [vmem:[#allocation2 + $0x108] sm:$0xff]
    %v267 = vld [vmem:[#allocation2 + $0x110] sm:$0xff]
    %v268 = vld [vmem:[#allocation2 + $0x118] sm:$0xff]
    %v269 = vld [vmem:[#allocation2 + $0x120] sm:$0xff]
    %v270 = vld [vmem:[#allocation2 + $0x128] sm:$0xff]
    %v271 = vld [vmem:[#allocation2 + $0x130] sm:$0xff]
    %v272 = vld [vmem:[#allocation2 + $0x138] sm:$0xff]
    %v273 = vld [vmem:[#allocation2 + $0x140] sm:$0xff]
    %v274 = vld [vmem:[#allocation2 + $0x148] sm:$0xff]
    %v275 = vld [vmem:[#allocation2 + $0x150] sm:$0xff]
    %v276 = vld [vmem:[#allocation2 + $0x158] sm:$0xff]
    %v277 = vld [vmem:[#allocation2 + $0x160] sm:$0xff]
    %v278 = vld [vmem:[#allocation2 + $0x168] sm:$0xff]
    %v279 = vld [vmem:[#allocation2 + $0x170] sm:$0xff]
    %v280 = vld [vmem:[#allocation2 + $0x178] sm:$0xff]
    %v281 = vld [vmem:[#allocation2 + $0x180] sm:$0xff]
    %v282 = vld [vmem:[#allocation2 + $0x188] sm:$0xff]
    %v283 = vld [vmem:[#allocation2 + $0x190] sm:$0xff]
    %v284 = vld [vmem:[#allocation2 + $0x198] sm:$0xff]
    %v285 = vld [vmem:[#allocation2 + $0x1a0] sm:$0xff]
    %v286 = vld [vmem:[#allocation2 + $0x1a8] sm:$0xff]
    %v287 = vld [vmem:[#allocation2 + $0x1b0] sm:$0xff]
    %v288 = vld [vmem:[#allocation2 + $0x1b8] sm:$0xff]
    %v289 = vld [vmem:[#allocation2 + $0x1c0] sm:$0xff]
    %v290 = vld [vmem:[#allocation2 + $0x1c8] sm:$0xff]
    %v291 = vld [vmem:[#allocation2 + $0x1d0] sm:$0xff]
    %v292 = vld [vmem:[#allocation2 + $0x1d8] sm:$0xff]
    %v293 = vld [vmem:[#allocation2 + $0x1e0] sm:$0xff]
    %v294 = vld [vmem:[#allocation2 + $0x1e8] sm:$0xff]
    %v295 = vld [vmem:[#allocation2 + $0x1f0] sm:$0xff]
    %v296 = vld [vmem:[#allocation2 + $0x1f8] sm:$0xff]
    %v297 = vld [vmem:[#allocation2 + $0x200] sm:$0xff]
    %v298 = vld [vmem:[#allocation2 + $0x208] sm:$0xff]
    %v299 = vld [vmem:[#allocation2 + $0x210] sm:$0xff]
    %v300 = vld [vmem:[#allocation2 + $0x218] sm:$0xff]
    %v301 = vld [vmem:[#allocation2 + $0x220] sm:$0xff]
    %v302 = vld [vmem:[#allocation2 + $0x228] sm:$0xff]
    %v303 = vld [vmem:[#allocation2 + $0x230] sm:$0xff]
    %v304 = vld [vmem:[#allocation2 + $0x238] sm:$0xff]
    %v305 = vld [vmem:[#allocation2 + $0x240] sm:$0xff]
    %v306 = vld [vmem:[#allocation2 + $0x248] sm:$0xff]
    %v307 = vld [vmem:[#allocation2 + $0x250] sm:$0xff]
    %v308 = vld [vmem:[#allocation2 + $0x258] sm:$0xff]
    %v309 = vld [vmem:[#allocation2 + $0x260] sm:$0xff]
    %v310 = vld [vmem:[#allocation2 + $0x268] sm:$0xff]
    %v311 = vld [vmem:[#allocation2 + $0x270] sm:$0xff]
    %v312 = vld [vmem:[#allocation2 + $0x278] sm:$0xff]
    %v313 = vld [vmem:[#allocation2 + $0x280] sm:$0xff]
    %v314 = vld [vmem:[#allocation2 + $0x288] sm:$0xff]
    %v315 = vld [vmem:[#allocation2 + $0x290] sm:$0xff]
    %v316 = vld [vmem:[#allocation2 + $0x298] sm:$0xff]
    %v317 = vld [vmem:[#allocation2 + $0x2a0] sm:$0xff]
    %v318 = vld [vmem:[#allocation2 + $0x2a8] sm:$0xff]
    %v319 = vld [vmem:[#allocation2 + $0x2b0] sm:$0xff]
    %v320 = vld [vmem:[#allocation2 + $0x2b8] sm:$0xff]
    %v321 = vld [vmem:[#allocation2 + $0x2c0] sm:$0xff]
    %v322 = vld [vmem:[#allocation2 + $0x2c8] sm:$0xff]
    %v323 = vld [vmem:[#allocation2 + $0x2d0] sm:$0xff]
    %v324 = vld [vmem:[#allocation2 + $0x2d8] sm:$0xff]
    %v325 = vld [vmem:[#allocation2 + $0x2e0] sm:$0xff]
    %v326 = vld [vmem:[#allocation2 + $0x2e8] sm:$0xff]
    %v327 = vld [vmem:[#allocation2 + $0x2f0] sm:$0xff]
    %v328 = vld [vmem:[#allocation2 + $0x2f8] sm:$0xff]
    %v329 = vlaneseq
    %v330 = vshrl.u32 %v329, 7
    %v331 = vsub.s32 0, %v330
    %v332 = vrot.slane %v153, %v331
    %v333 = vlaneseq
    %v334 = vshrl.u32 %v333, 7
    %v335 = vsub.s32 0, %v334
    %v336 = vrot.slane %v155, %v335
    %v337 = vlaneseq
    %v338 = vshrl.u32 %v337, 7
    %v339 = vsub.s32 0, %v338
    %v340 = vrot.slane %v224, %v339
    %v341 = vmul.f32 %v332, %v227
    %v342 = vmul.f32 %v336, %v228
    %v343 = vmul.f32 %v340, %v229
    %v344 = vmul.f32 %v332, %v230
    %v345 = vmul.f32 %v336, %v231
    %v346 = vmul.f32 %v340, %v232
    %347 = vmatprep.subr.mxu0 %v234
    %348 = vmatpush1.msra.mxu0 %v233
    %349 = vmatprep.subr.mxu0 %v236
    %350 = vmatpush1.msra.mxu0 %v235
    %351 = vmatprep.subr.mxu0 %v238
    %352 = vmatpush1.msra.mxu0 %v237
    %353 = vmatprep.subr.mxu0 %v240
    %354 = vmatpush1.msra.mxu0 %v239
    %355 = vmatprep.subr.mxu0 %v242
    %356 = vmatpush1.msra.mxu0 %v241
    %357 = vmatprep.subr.mxu0 %v244
    %358 = vmatpush1.msra.mxu0 %v243
    %359 = vmatprep.subr.mxu0 %v246
    %360 = vmatpush1.msra.mxu0 %v245
    %361 = vmatprep.subr.mxu0 %v248
    %362 = vmatpush1.msra.mxu0 %v247
    %363 = vmatprep.subr.mxu0 %v250
    %364 = vmatpush1.msra.mxu0 %v249
    %365 = vmatprep.subr.mxu0 %v252
    %366 = vmatpush1.msra.mxu0 %v251
    %367 = vmatprep.subr.mxu0 %v254
    %368 = vmatpush1.msra.mxu0 %v253
    %369 = vmatprep.subr.mxu0 %v256
    %370 = vmatpush1.msra.mxu0 %v255
    %371 = vmatprep.subr.mxu0 %v258
    %372 = vmatpush1.msra.mxu0 %v257
    %373 = vmatprep.subr.mxu0 %v260
    %374 = vmatpush1.msra.mxu0 %v259
    %375 = vmatprep.subr.mxu0 %v262
    %376 = vmatpush1.msra.mxu0 %v261
    %377 = vmatprep.subr.mxu0 %v264
    %378 = vmatpush1.msra.mxu0 %v263
    %379 = vmatprep.subr.mxu0 %v266
    %380 = vmatpush1.msra.mxu0 %v265
    %381 = vmatprep.subr.mxu0 %v268
    %382 = vmatpush1.msra.mxu0 %v267
    %383 = vmatprep.subr.mxu0 %v270
    %384 = vmatpush1.msra.mxu0 %v269
    %385 = vmatprep.subr.mxu0 %v272
    %386 = vmatpush1.msra.mxu0 %v271
    %387 = vmatprep.subr.mxu0 %v274
    %388 = vmatpush1.msra.mxu0 %v273
    %389 = vmatprep.subr.mxu0 %v276
    %390 = vmatpush1.msra.mxu0 %v275
    %391 = vmatprep.subr.mxu0 %v278
    %392 = vmatpush1.msra.mxu0 %v277
    %393 = vmatprep.subr.mxu0 %v280
    %394 = vmatpush1.msra.mxu0 %v279
    %395 = vmatprep.subr.mxu0 %v282
    %396 = vmatpush1.msra.mxu0 %v281
    %397 = vmatprep.subr.mxu0 %v284
    %398 = vmatpush1.msra.mxu0 %v283
    %399 = vmatprep.subr.mxu0 %v286
    %400 = vmatpush1.msra.mxu0 %v285
    %401 = vmatprep.subr.mxu0 %v288
    %402 = vmatpush1.msra.mxu0 %v287
    %403 = vmatprep.subr.mxu0 %v290
    %404 = vmatpush1.msra.mxu0 %v289
    %405 = vmatprep.subr.mxu0 %v292
    %406 = vmatpush1.msra.mxu0 %v291
    %407 = vmatprep.subr.mxu0 %v294
    %408 = vmatpush1.msra.mxu0 %v293
    %409 = vmatprep.subr.mxu0 %v296
    %410 = vmatpush1.msra.mxu0 %v295
    %411 = vmatprep.mubr.f32.mxu0 %v342
    %412 = vmatmul.mubr.f32.gmra.mrb[0].mxu0 %v341
    %v413 = vpop.f32.mrb[0].mxu0
    %v414 = vadd.f32 0.0, %v413
    %v415 = vpop.f32.mrb[0].mxu0
    %v416 = vadd.f32 0.0, %v415
    %417 = vmatprep.mubr.f32.mxu0 %v345
    %418 = vmatmul.mubr.f32.gmra.mrb[0].mxu0 %v344
    %v419 = vpop.f32.mrb[0].mxu0
    %v420 = vadd.f32 0.0, %v419
    %v421 = vpop.f32.mrb[0].mxu0
    %v422 = vadd.f32 0.0, %v421
    %423 = vdwg.mxu0
    %424 = vmatprep.subr.mxu0 %v298
    %425 = vmatpush1.msra.mxu0 %v297
    %426 = vmatprep.subr.mxu0 %v300
    %427 = vmatpush1.msra.mxu0 %v299
    %428 = vmatprep.subr.mxu0 %v302
    %429 = vmatpush1.msra.mxu0 %v301
    %430 = vmatprep.subr.mxu0 %v304
    %431 = vmatpush1.msra.mxu0 %v303
    %432 = vmatprep.subr.mxu0 %v306
    %433 = vmatpush1.msra.mxu0 %v305
    %434 = vmatprep.subr.mxu0 %v308
    %435 = vmatpush1.msra.mxu0 %v307
    %436 = vmatprep.subr.mxu0 %v310
    %437 = vmatpush1.msra.mxu0 %v309
    %438 = vmatprep.subr.mxu0 %v312
    %439 = vmatpush1.msra.mxu0 %v311
    %440 = vmatprep.subr.mxu0 %v314
    %441 = vmatpush1.msra.mxu0 %v313
    %442 = vmatprep.subr.mxu0 %v316
    %443 = vmatpush1.msra.mxu0 %v315
    %444 = vmatprep.subr.mxu0 %v318
    %445 = vmatpush1.msra.mxu0 %v317
    %446 = vmatprep.subr.mxu0 %v320
    %447 = vmatpush1.msra.mxu0 %v319
    %448 = vmatprep.subr.mxu0 %v322
    %449 = vmatpush1.msra.mxu0 %v321
    %450 = vmatprep.subr.mxu0 %v324
    %451 = vmatpush1.msra.mxu0 %v323
    %452 = vmatprep.subr.mxu0 %v326
    %453 = vmatpush1.msra.mxu0 %v325
    %454 = vmatprep.subr.mxu0 %v328
    %455 = vmatpush1.msra.mxu0 %v327
    %456 = vmatprep.subr.mxu0 0.0
    %457 = vmatpush1.msra.mxu0 0.0
    %458 = vmatprep.subr.mxu0 0.0
    %459 = vmatpush1.msra.mxu0 0.0
    %460 = vmatprep.subr.mxu0 0.0
    %461 = vmatpush1.msra.mxu0 0.0
    %462 = vmatprep.subr.mxu0 0.0
    %463 = vmatpush1.msra.mxu0 0.0
    %464 = vmatprep.subr.mxu0 0.0
    %465 = vmatpush1.msra.mxu0 0.0
    %466 = vmatprep.subr.mxu0 0.0
    %467 = vmatpush1.msra.mxu0 0.0
    %468 = vmatprep.subr.mxu0 0.0
    %469 = vmatpush1.msra.mxu0 0.0
    %470 = vmatprep.subr.mxu0 0.0
    %471 = vmatpush1.msra.mxu0 0.0
    %472 = vmatprep.subr.mxu0 0.0
    %473 = vmatpush1.msra.mxu0 0.0
    %474 = vmatprep.subr.mxu0 0.0
    %475 = vmatpush1.msra.mxu0 0.0
    %476 = vmatprep.subr.mxu0 0.0
    %477 = vmatpush1.msra.mxu0 0.0
    %478 = vmatprep.subr.mxu0 0.0
    %479 = vmatpush1.msra.mxu0 0.0
    %480 = vmatprep.subr.mxu0 0.0
    %481 = vmatpush1.msra.mxu0 0.0
    %482 = vmatprep.subr.mxu0 0.0
    %483 = vmatpush1.msra.mxu0 0.0
    %484 = vmatprep.subr.mxu0 0.0
    %485 = vmatpush1.msra.mxu0 0.0
    %486 = vmatprep.subr.mxu0 0.0
    %487 = vmatpush1.msra.mxu0 0.0
    %488 = vmatprep.mubr.f32.mxu0 0.0
    %489 = vmatmul.mubr.f32.gmra.mrb[0].mxu0 %v343
    %v490 = vpop.f32.mrb[0].mxu0
    %v491 = vadd.f32 %v414, %v490
    %v492 = vpop.f32.mrb[0].mxu0
    %v493 = vadd.f32 %v416, %v492
    %494 = vmatprep.mubr.f32.mxu0 0.0
    %495 = vmatmul.mubr.f32.gmra.mrb[0].mxu0 %v346
    %v496 = vpop.f32.mrb[0].mxu0
    %v497 = vadd.f32 %v420, %v496
    %v498 = vpop.f32.mrb[0].mxu0
    %v499 = vadd.f32 %v422, %v498
    %500 = vdwg.mxu0
    %v501 = vlaneseq
    %v502 = vshrl.u32 %v501, 7
    %v503 = vsub.s32 1, %v502
    %v504 = vrot.slane %v153, %v503
    %v505 = vlaneseq
    %v506 = vshrl.u32 %v505, 7
    %v507 = vsub.s32 1, %v506
    %v508 = vrot.slane %v155, %v507
    %v509 = vlaneseq
    %v510 = vshrl.u32 %v509, 7
    %v511 = vsub.s32 1, %v510
    %v512 = vrot.slane %v224, %v511
    %v513 = vmul.f32 %v504, %v227
    %v514 = vmul.f32 %v508, %v228
    %v515 = vmul.f32 %v512, %v229
    %v516 = vmul.f32 %v504, %v230
    %v517 = vmul.f32 %v508, %v231
    %v518 = vmul.f32 %v512, %v232
    %519 = vmatprep.subr.mxu0 %v234
    %520 = vmatpush1.msra.mxu0 %v233
    %521 = vmatprep.subr.mxu0 %v236
    %522 = vmatpush1.msra.mxu0 %v235
    %523 = vmatprep.subr.mxu0 %v238
    %524 = vmatpush1.msra.mxu0 %v237
    %525 = vmatprep.subr.mxu0 %v240
    %526 = vmatpush1.msra.mxu0 %v239
    %527 = vmatprep.subr.mxu0 %v242
    %528 = vmatpush1.msra.mxu0 %v241
    %529 = vmatprep.subr.mxu0 %v244
    %530 = vmatpush1.msra.mxu0 %v243
    %531 = vmatprep.subr.mxu0 %v246
    %532 = vmatpush1.msra.mxu0 %v245
    %533 = vmatprep.subr.mxu0 %v248
    %534 = vmatpush1.msra.mxu0 %v247
    %535 = vmatprep.subr.mxu0 %v250
    %536 = vmatpush1.msra.mxu0 %v249
    %537 = vmatprep.subr.mxu0 %v252
    %538 = vmatpush1.msra.mxu0 %v251
    %539 = vmatprep.subr.mxu0 %v254
    %540 = vmatpush1.msra.mxu0 %v253
    %541 = vmatprep.subr.mxu0 %v256
    %542 = vmatpush1.msra.mxu0 %v255
    %543 = vmatprep.subr.mxu0 %v258
    %544 = vmatpush1.msra.mxu0 %v257
    %545 = vmatprep.subr.mxu0 %v260
    %546 = vmatpush1.msra.mxu0 %v259
    %547 = vmatprep.subr.mxu0 %v262
    %548 = vmatpush1.msra.mxu0 %v261
    %549 = vmatprep.subr.mxu0 %v264
    %550 = vmatpush1.msra.mxu0 %v263
    %551 = vmatprep.subr.mxu0 %v266
    %552 = vmatpush1.msra.mxu0 %v265
    %553 = vmatprep.subr.mxu0 %v268
    %554 = vmatpush1.msra.mxu0 %v267
    %555 = vmatprep.subr.mxu0 %v270
    %556 = vmatpush1.msra.mxu0 %v269
    %557 = vmatprep.subr.mxu0 %v272
    %558 = vmatpush1.msra.mxu0 %v271
    %559 = vmatprep.subr.mxu0 %v274
    %560 = vmatpush1.msra.mxu0 %v273
    %561 = vmatprep.subr.mxu0 %v276
    %562 = vmatpush1.msra.mxu0 %v275
    %563 = vmatprep.subr.mxu0 %v278
    %564 = vmatpush1.msra.mxu0 %v277
    %565 = vmatprep.subr.mxu0 %v280
    %566 = vmatpush1.msra.mxu0 %v279
    %567 = vmatprep.subr.mxu0 %v282
    %568 = vmatpush1.msra.mxu0 %v281
    %569 = vmatprep.subr.mxu0 %v284
    %570 = vmatpush1.msra.mxu0 %v283
    %571 = vmatprep.subr.mxu0 %v286
    %572 = vmatpush1.msra.mxu0 %v285
    %573 = vmatprep.subr.mxu0 %v288
    %574 = vmatpush1.msra.mxu0 %v287
    %575 = vmatprep.subr.mxu0 %v290
    %576 = vmatpush1.msra.mxu0 %v289
    %577 = vmatprep.subr.mxu0 %v292
    %578 = vmatpush1.msra.mxu0 %v291
    %579 = vmatprep.subr.mxu0 %v294
    %580 = vmatpush1.msra.mxu0 %v293
    %581 = vmatprep.subr.mxu0 %v296
    %582 = vmatpush1.msra.mxu0 %v295
    %583 = vmatprep.mubr.f32.mxu0 %v514
    %584 = vmatmul.mubr.f32.gmra.mrb[0].mxu0 %v513
    %v585 = vpop.f32.mrb[0].mxu0
    %v586 = vadd.f32 0.0, %v585
    %v587 = vpop.f32.mrb[0].mxu0
    %v588 = vadd.f32 0.0, %v587
    %589 = vmatprep.mubr.f32.mxu0 %v517
    %590 = vmatmul.mubr.f32.gmra.mrb[0].mxu0 %v516
    %v591 = vpop.f32.mrb[0].mxu0
    %v592 = vadd.f32 0.0, %v591
    %v593 = vpop.f32.mrb[0].mxu0
    %v594 = vadd.f32 0.0, %v593
    %595 = vdwg.mxu0
    %596 = vmatprep.subr.mxu0 %v298
    %597 = vmatpush1.msra.mxu0 %v297
    %598 = vmatprep.subr.mxu0 %v300
    %599 = vmatpush1.msra.mxu0 %v299
    %600 = vmatprep.subr.mxu0 %v302
    %601 = vmatpush1.msra.mxu0 %v301
    %602 = vmatprep.subr.mxu0 %v304
    %603 = vmatpush1.msra.mxu0 %v303
    %604 = vmatprep.subr.mxu0 %v306
    %605 = vmatpush1.msra.mxu0 %v305
    %606 = vmatprep.subr.mxu0 %v308
    %607 = vmatpush1.msra.mxu0 %v307
    %608 = vmatprep.subr.mxu0 %v310
    %609 = vmatpush1.msra.mxu0 %v309
    %610 = vmatprep.subr.mxu0 %v312
    %611 = vmatpush1.msra.mxu0 %v311
    %612 = vmatprep.subr.mxu0 %v314
    %613 = vmatpush1.msra.mxu0 %v313
    %614 = vmatprep.subr.mxu0 %v316
    %615 = vmatpush1.msra.mxu0 %v315
    %616 = vmatprep.subr.mxu0 %v318
    %617 = vmatpush1.msra.mxu0 %v317
    %618 = vmatprep.subr.mxu0 %v320
    %619 = vmatpush1.msra.mxu0 %v319
    %620 = vmatprep.subr.mxu0 %v322
    %621 = vmatpush1.msra.mxu0 %v321
    %622 = vmatprep.subr.mxu0 %v324
    %623 = vmatpush1.msra.mxu0 %v323
    %624 = vmatprep.subr.mxu0 %v326
    %625 = vmatpush1.msra.mxu0 %v325
    %626 = vmatprep.subr.mxu0 %v328
    %627 = vmatpush1.msra.mxu0 %v327
    %628 = vmatprep.subr.mxu0 0.0
    %629 = vmatpush1.msra.mxu0 0.0
    %630 = vmatprep.subr.mxu0 0.0
    %631 = vmatpush1.msra.mxu0 0.0
    %632 = vmatprep.subr.mxu0 0.0
    %633 = vmatpush1.msra.mxu0 0.0
    %634 = vmatprep.subr.mxu0 0.0
    %635 = vmatpush1.msra.mxu0 0.0
    %636 = vmatprep.subr.mxu0 0.0
    %637 = vmatpush1.msra.mxu0 0.0
    %638 = vmatprep.subr.mxu0 0.0
    %639 = vmatpush1.msra.mxu0 0.0
    %640 = vmatprep.subr.mxu0 0.0
    %641 = vmatpush1.msra.mxu0 0.0
    %642 = vmatprep.subr.mxu0 0.0
    %643 = vmatpush1.msra.mxu0 0.0
    %644 = vmatprep.subr.mxu0 0.0
    %645 = vmatpush1.msra.mxu0 0.0
    %646 = vmatprep.subr.mxu0 0.0
    %647 = vmatpush1.msra.mxu0 0.0
    %648 = vmatprep.subr.mxu0 0.0
    %649 = vmatpush1.msra.mxu0 0.0
    %650 = vmatprep.subr.mxu0 0.0
    %651 = vmatpush1.msra.mxu0 0.0
    %652 = vmatprep.subr.mxu0 0.0
    %653 = vmatpush1.msra.mxu0 0.0
    %654 = vmatprep.subr.mxu0 0.0
    %655 = vmatpush1.msra.mxu0 0.0
    %656 = vmatprep.subr.mxu0 0.0
    %657 = vmatpush1.msra.mxu0 0.0
    %658 = vmatprep.subr.mxu0 0.0
    %659 = vmatpush1.msra.mxu0 0.0
    %660 = vmatprep.mubr.f32.mxu0 0.0
    %661 = vmatmul.mubr.f32.gmra.mrb[0].mxu0 %v515
    %v662 = vpop.f32.mrb[0].mxu0
    %v663 = vadd.f32 %v586, %v662
    %v664 = vpop.f32.mrb[0].mxu0
    %v665 = vadd.f32 %v588, %v664
    %666 = vmatprep.mubr.f32.mxu0 0.0
    %667 = vmatmul.mubr.f32.gmra.mrb[0].mxu0 %v518
    %v668 = vpop.f32.mrb[0].mxu0
    %v669 = vadd.f32 %v592, %v668
    %v670 = vpop.f32.mrb[0].mxu0
    %v671 = vadd.f32 %v594, %v670
    %672 = vdwg.mxu0
    %677 = vrot.lane.b32.xlu0 %v491, 127
    %v678 = vpop.permute.xlu0 %677
    %679 = vrot.lane.b32.xlu0 %v493, 127
    %v680 = vpop.permute.xlu0 %679
    %681 = vrot.lane.b32.xlu0 %v497, 127
    %v682 = vpop.permute.xlu0 %681
    %683 = vrot.lane.b32.xlu0 %v499, 127
    %v684 = vpop.permute.xlu0 %683
    %vm685 = vcmask 1039360
    %v686 = vsel %vm685, %v678, %v680
    %v687 = vsel %vm685, %v682, %v684
    %694 = vrot.lane.b32.xlu0 %v663, 127
    %v695 = vpop.permute.xlu0 %694
    %696 = vrot.lane.b32.xlu0 %v665, 127
    %v697 = vpop.permute.xlu0 %696
    %698 = vrot.lane.b32.xlu0 %v669, 127
    %v699 = vpop.permute.xlu0 %698
    %700 = vrot.lane.b32.xlu0 %v671, 127
    %v701 = vpop.permute.xlu0 %700
    %v702 = vsel %vm685, %v695, %v697
    %v703 = vsel %vm685, %v699, %v701
    %706 = vrot.lane.b32.xlu0 %v491, 126
    %v707 = vpop.permute.xlu0 %706
    %708 = vrot.lane.b32.xlu0 %v493, 126
    %v709 = vpop.permute.xlu0 %708
    %710 = vrot.lane.b32.xlu0 %v497, 126
    %v711 = vpop.permute.xlu0 %710
    %712 = vrot.lane.b32.xlu0 %v499, 126
    %v713 = vpop.permute.xlu0 %712
    %vm714 = vcmask 1031168
    %v715 = vsel %vm714, %v707, %v709
    %v716 = vsel %vm714, %v711, %v713
    %719 = vrot.lane.b32.xlu0 %v663, 126
    %v720 = vpop.permute.xlu0 %719
    %721 = vrot.lane.b32.xlu0 %v665, 126
    %v722 = vpop.permute.xlu0 %721
    %723 = vrot.lane.b32.xlu0 %v669, 126
    %v724 = vpop.permute.xlu0 %723
    %725 = vrot.lane.b32.xlu0 %v671, 126
    %v726 = vpop.permute.xlu0 %725
    %v727 = vsel %vm714, %v720, %v722
    %v728 = vsel %vm714, %v724, %v726
    %731 = vrot.lane.b32.xlu0 %v491, 125
    %v732 = vpop.permute.xlu0 %731
    %733 = vrot.lane.b32.xlu0 %v493, 125
    %v734 = vpop.permute.xlu0 %733
    %735 = vrot.lane.b32.xlu0 %v497, 125
    %v736 = vpop.permute.xlu0 %735
    %737 = vrot.lane.b32.xlu0 %v499, 125
    %v738 = vpop.permute.xlu0 %737
    %vm739 = vcmask 1022976
    %v740 = vsel %vm739, %v732, %v734
    %v741 = vsel %vm739, %v736, %v738
    %744 = vrot.lane.b32.xlu0 %v663, 125
    %v745 = vpop.permute.xlu0 %744
    %746 = vrot.lane.b32.xlu0 %v665, 125
    %v747 = vpop.permute.xlu0 %746
    %748 = vrot.lane.b32.xlu0 %v669, 125
    %v749 = vpop.permute.xlu0 %748
    %750 = vrot.lane.b32.xlu0 %v671, 125
    %v751 = vpop.permute.xlu0 %750
    %v752 = vsel %vm739, %v745, %v747
    %v753 = vsel %vm739, %v749, %v751
    %756 = vrot.lane.b32.xlu0 %v491, 124
    %v757 = vpop.permute.xlu0 %756
    %758 = vrot.lane.b32.xlu0 %v493, 124
    %v759 = vpop.permute.xlu0 %758
    %760 = vrot.lane.b32.xlu0 %v497, 124
    %v761 = vpop.permute.xlu0 %760
    %762 = vrot.lane.b32.xlu0 %v499, 124
    %v763 = vpop.permute.xlu0 %762
    %vm764 = vcmask 1014784
    %v765 = vsel %vm764, %v757, %v759
    %v766 = vsel %vm764, %v761, %v763
    %769 = vrot.lane.b32.xlu0 %v663, 124
    %v770 = vpop.permute.xlu0 %769
    %771 = vrot.lane.b32.xlu0 %v665, 124
    %v772 = vpop.permute.xlu0 %771
    %773 = vrot.lane.b32.xlu0 %v669, 124
    %v774 = vpop.permute.xlu0 %773
    %775 = vrot.lane.b32.xlu0 %v671, 124
    %v776 = vpop.permute.xlu0 %775
    %v777 = vsel %vm764, %v770, %v772
    %v778 = vsel %vm764, %v774, %v776
    %v781 = vld [vmem:[%s5] sm:$0xff]
    %v782 = vld [vmem:[%s5 + $0x8] sm:$0xff]
    %v783 = vld [vmem:[%s6] sm:$0xff]
    %v784 = vld [vmem:[%s6 + $0x8] sm:$0xff]
    %v785 = vld [vmem:[%s6 + $0x10] sm:$0xff]
    %v786 = vld [vmem:[%s6 + $0x18] sm:$0xff]
    %vm787 = vcmask 654336
    %v789 = vsel %vm787, %v781, 0
    %v792 = vsel %vm787, %v782, 0
    %794 = vmatprep.subr.mxu0 %v663
    %795 = vmatpush1.msra.mxu0 %v491
    %796 = vmatprep.subr.mxu0 %v669
    %797 = vmatpush1.msra.mxu0 %v497
    %798 = vmatprep.subr.mxu0 %v702
    %799 = vmatpush1.msra.mxu0 %v686
    %800 = vmatprep.subr.mxu0 %v703
    %801 = vmatpush1.msra.mxu0 %v687
    %802 = vmatprep.subr.mxu0 %v727
    %803 = vmatpush1.msra.mxu0 %v715
    %804 = vmatprep.subr.mxu0 %v728
    %805 = vmatpush1.msra.mxu0 %v716
    %806 = vmatprep.subr.mxu0 %v752
    %807 = vmatpush1.msra.mxu0 %v740
    %808 = vmatprep.subr.mxu0 %v753
    %809 = vmatpush1.msra.mxu0 %v741
    %810 = vmatprep.subr.mxu0 %v777
    %811 = vmatpush1.msra.mxu0 %v765
    %812 = vmatprep.subr.mxu0 %v778
    %813 = vmatpush1.msra.mxu0 %v766
    %814 = vmatprep.subr.mxu0 0.0
    %815 = vmatpush1.msra.mxu0 0.0
    %816 = vmatprep.subr.mxu0 0.0
    %817 = vmatpush1.msra.mxu0 0.0
    %818 = vmatprep.subr.mxu0 0.0
    %819 = vmatpush1.msra.mxu0 0.0
    %820 = vmatprep.subr.mxu0 0.0
    %821 = vmatpush1.msra.mxu0 0.0
    %822 = vmatprep.subr.mxu0 0.0
    %823 = vmatpush1.msra.mxu0 0.0
    %824 = vmatprep.subr.mxu0 0.0
    %825 = vmatpush1.msra.mxu0 0.0
    %826 = vmatprep.subr.mxu0 0.0
    %827 = vmatpush1.msra.mxu0 0.0
    %828 = vmatprep.subr.mxu0 0.0
    %829 = vmatpush1.msra.mxu0 0.0
    %830 = vmatprep.subr.mxu0 0.0
    %831 = vmatpush1.msra.mxu0 0.0
    %832 = vmatprep.subr.mxu0 0.0
    %833 = vmatpush1.msra.mxu0 0.0
    %834 = vmatprep.subr.mxu0 0.0
    %835 = vmatpush1.msra.mxu0 0.0
    %836 = vmatprep.subr.mxu0 0.0
    %837 = vmatpush1.msra.mxu0 0.0
    %838 = vmatprep.subr.mxu0 0.0
    %839 = vmatpush1.msra.mxu0 0.0
    %840 = vmatprep.subr.mxu0 0.0
    %841 = vmatpush1.msra.mxu0 0.0
    %842 = vmatprep.subr.mxu0 0.0
    %843 = vmatpush1.msra.mxu0 0.0
    %844 = vmatprep.subr.mxu0 0.0
    %845 = vmatpush1.msra.mxu0 0.0
    %846 = vmatprep.subr.mxu0 0.0
    %847 = vmatpush1.msra.mxu0 0.0
    %848 = vmatprep.subr.mxu0 0.0
    %849 = vmatpush1.msra.mxu0 0.0
    %850 = vmatprep.subr.mxu0 0.0
    %851 = vmatpush1.msra.mxu0 0.0
    %852 = vmatprep.subr.mxu0 0.0
    %853 = vmatpush1.msra.mxu0 0.0
    %854 = vmatprep.subr.mxu0 0.0
    %855 = vmatpush1.msra.mxu0 0.0
    %856 = vmatprep.subr.mxu0 0.0
    %857 = vmatpush1.msra.mxu0 0.0
    %858 = vmatprep.mubr.f32.mxu0 0.0
    %859 = vmatmul.mubr.f32.gmra.mrb[0].mxu0 %v789
    %v860 = vpop.f32.mrb[0].mxu0
    %v861 = vadd.f32 %v783, %v860
    %v862 = vpop.f32.mrb[0].mxu0
    %v863 = vadd.f32 %v784, %v862
    %864 = vmatprep.mubr.f32.mxu0 0.0
    %865 = vmatmul.mubr.f32.gmra.mrb[0].mxu0 %v792
    %v866 = vpop.f32.mrb[0].mxu0
    %v867 = vadd.f32 %v785, %v866
    %v868 = vpop.f32.mrb[0].mxu0
    %v869 = vadd.f32 %v786, %v868
    %870 = vdwg.mxu0
    %vm871 = vcmp.gt.f32.partialorder %v861, 0.0
    %vm872 = vcmp.gt.f32.partialorder %v863, 0.0
    %vm873 = vcmp.gt.f32.partialorder %v867, 0.0
    %vm874 = vcmp.gt.f32.partialorder %v869, 0.0
    %v875 = vmul.f32 %v861, 0.01
    %v876 = vmul.f32 %v863, 0.01
    %v877 = vmul.f32 %v867, 0.01
    %v878 = vmul.f32 %v869, 0.01
    %v879 = vsel %vm871, %v861, %v875
    %v880 = vsel %vm872, %v863, %v876
    %v881 = vsel %vm873, %v867, %v877
    %v882 = vsel %vm874, %v869, %v878
    %v883 = vlaneseq
    %v884 = vand.u32 %v883, 127
    %v885 = vadd.s32 %v884, 128
    %vm886 = vcmp.lt.s32.totalorder %v884, 0
    %v887 = vsub.s32 0, %v884
    %v888 = vsel %vm886, %v887, %v884
    %v889 = vshrl.u32 %v888, 7
    %v890 = vand.u32 %v888, 127
    %v891 = vsub.s32 0, %v890
    %v892 = vsel %vm886, %v891, %v890
    %vm893 = vcmp.lt.s32.totalorder %v885, 0
    %v894 = vsub.s32 0, %v885
    %v895 = vsel %vm893, %v894, %v885
    %v896 = vshrl.u32 %v895, 7
    %v897 = vand.u32 %v895, 127
    %v898 = vsub.s32 0, %v897
    %v899 = vsel %vm893, %v898, %v897
    %vm900 = vcmp.ne.s32.totalorder %v892, 0
    %vm901 = vcmp.ne.s32.totalorder %v899, 0
    %vm902 = vcmp.lt.s32.totalorder %v892, 0
    %vm903 = vcmp.lt.s32.totalorder %v899, 0
    %vm904 = vmand %vm902, %vm900
    %vm905 = vmand %vm903, %vm901
    %v906 = vadd.s32 %v892, 128
    %v907 = vadd.s32 %v899, 128
    %v908 = vsel %vm904, %v906, %v892
    %v909 = vsel %vm905, %v907, %v899
    %vm910 = vcmp.ne.s32.totalorder %v908, 0
    %vm911 = vcmp.ne.s32.totalorder %v909, 0
    %vm912 = vcmp.ne.s32.totalorder %v908, 127
    %vm913 = vcmp.ne.s32.totalorder %v909, 127
    %916 = vrot.lane.b32.xlu0 %v880, 1
    %v917 = vpop.permute.xlu0 %916
    %918 = vrot.lane.b32.xlu0 %v882, 1
    %v919 = vpop.permute.xlu0 %918
    %924 = vrot.lane.b32.xlu0 %v879, 1
    %v925 = vpop.permute.xlu0 %924
    %926 = vrot.lane.b32.xlu0 %v881, 1
    %v927 = vpop.permute.xlu0 %926
    %vm928 = vcmask 7168
    %v929 = vsel %vm928, %v925, %v917
    %v930 = vsel %vm928, %v927, %v919
    %v935 = vsel %vm928, %v917, %v925
    %v936 = vsel %vm928, %v919, %v927
    %v937 = vsel %vm910, %v935, 0.0
    %v938 = vsel %vm911, %v929, 0.0
    %v939 = vsel %vm910, %v936, 0.0
    %v940 = vsel %vm911, %v930, 0.0
    %941 = vrot.lane.b32.xlu0 %v879, 127
    %v942 = vpop.permute.xlu0 %941
    %943 = vrot.lane.b32.xlu0 %v880, 127
    %v944 = vpop.permute.xlu0 %943
    %945 = vrot.lane.b32.xlu0 %v881, 127
    %v946 = vpop.permute.xlu0 %945
    %947 = vrot.lane.b32.xlu0 %v882, 127
    %v948 = vpop.permute.xlu0 %947
    %v949 = vsel %vm685, %v942, %v944
    %v950 = vsel %vm685, %v946, %v948
    %v957 = vsel %vm685, %v944, %v942
    %v958 = vsel %vm685, %v948, %v946
    %v959 = vsel %vm912, %v949, 0.0
    %v960 = vsel %vm913, %v957, 0.0
    %v961 = vsel %vm912, %v950, 0.0
    %v962 = vsel %vm913, %v958, 0.0
    %v963 = vld [vmem:[%s7] sm:$0xff]
    %v964 = vld [vmem:[%s7 + $0x8] sm:$0xff]
    %v965 = vld [vmem:[%s8] sm:$0xff]
    %v966 = vld [vmem:[%s8 + $0x8] sm:$0xff]
    %v967 = vld [vmem:[%s8 + $0x10] sm:$0xff]
    %v968 = vld [vmem:[%s8 + $0x18] sm:$0xff]
    %vm969 = vcmask 392192
    %v971 = vsel %vm969, %v963, 0
    %v974 = vsel %vm969, %v964, 0
    %976 = vmatprep.subr.mxu0 %v938
    %977 = vmatpush1.msra.mxu0 %v937
    %978 = vmatprep.subr.mxu0 %v940
    %979 = vmatpush1.msra.mxu0 %v939
    %980 = vmatprep.subr.mxu0 %v880
    %981 = vmatpush1.msra.mxu0 %v879
    %982 = vmatprep.subr.mxu0 %v882
    %983 = vmatpush1.msra.mxu0 %v881
    %984 = vmatprep.subr.mxu0 %v960
    %985 = vmatpush1.msra.mxu0 %v959
    %986 = vmatprep.subr.mxu0 %v962
    %987 = vmatpush1.msra.mxu0 %v961
    %988 = vmatprep.subr.mxu0 0.0
    %989 = vmatpush1.msra.mxu0 0.0
    %990 = vmatprep.subr.mxu0 0.0
    %991 = vmatpush1.msra.mxu0 0.0
    %992 = vmatprep.subr.mxu0 0.0
    %993 = vmatpush1.msra.mxu0 0.0
    %994 = vmatprep.subr.mxu0 0.0
    %995 = vmatpush1.msra.mxu0 0.0
    %996 = vmatprep.subr.mxu0 0.0
    %997 = vmatpush1.msra.mxu0 0.0
    %998 = vmatprep.subr.mxu0 0.0
    %999 = vmatpush1.msra.mxu0 0.0
    %1000 = vmatprep.subr.mxu0 0.0
    %1001 = vmatpush1.msra.mxu0 0.0
    %1002 = vmatprep.subr.mxu0 0.0
    %1003 = vmatpush1.msra.mxu0 0.0
    %1004 = vmatprep.subr.mxu0 0.0
    %1005 = vmatpush1.msra.mxu0 0.0
    %1006 = vmatprep.subr.mxu0 0.0
    %1007 = vmatpush1.msra.mxu0 0.0
    %1008 = vmatprep.subr.mxu0 0.0
    %1009 = vmatpush1.msra.mxu0 0.0
    %1010 = vmatprep.subr.mxu0 0.0
    %1011 = vmatpush1.msra.mxu0 0.0
    %1012 = vmatprep.subr.mxu0 0.0
    %1013 = vmatpush1.msra.mxu0 0.0
    %1014 = vmatprep.subr.mxu0 0.0
    %1015 = vmatpush1.msra.mxu0 0.0
    %1016 = vmatprep.subr.mxu0 0.0
    %1017 = vmatpush1.msra.mxu0 0.0
    %1018 = vmatprep.subr.mxu0 0.0
    %1019 = vmatpush1.msra.mxu0 0.0
    %1020 = vmatprep.subr.mxu0 0.0
    %1021 = vmatpush1.msra.mxu0 0.0
    %1022 = vmatprep.subr.mxu0 0.0
    %1023 = vmatpush1.msra.mxu0 0.0
    %1024 = vmatprep.subr.mxu0 0.0
    %1025 = vmatpush1.msra.mxu0 0.0
    %1026 = vmatprep.subr.mxu0 0.0
    %1027 = vmatpush1.msra.mxu0 0.0
    %1028 = vmatprep.subr.mxu0 0.0
    %1029 = vmatpush1.msra.mxu0 0.0
    %1030 = vmatprep.subr.mxu0 0.0
    %1031 = vmatpush1.msra.mxu0 0.0
    %1032 = vmatprep.subr.mxu0 0.0
    %1033 = vmatpush1.msra.mxu0 0.0
    %1034 = vmatprep.subr.mxu0 0.0
    %1035 = vmatpush1.msra.mxu0 0.0
    %1036 = vmatprep.subr.mxu0 0.0
    %1037 = vmatpush1.msra.mxu0 0.0
    %1038 = vmatprep.subr.mxu0 0.0
    %1039 = vmatpush1.msra.mxu0 0.0
    %1040 = vmatprep.mubr.f32.mxu0 0.0
    %1041 = vmatmul.mubr.f32.gmra.mrb[0].mxu0 %v971
    %v1042 = vpop.f32.mrb[0].mxu0
    %v1043 = vadd.f32 %v965, %v1042
    %v1044 = vpop.f32.mrb[0].mxu0
    %v1045 = vadd.f32 %v966, %v1044
    %1046 = vmatprep.mubr.f32.mxu0 0.0
    %1047 = vmatmul.mubr.f32.gmra.mrb[0].mxu0 %v974
    %v1048 = vpop.f32.mrb[0].mxu0
    %v1049 = vadd.f32 %v967, %v1048
    %v1050 = vpop.f32.mrb[0].mxu0
    %v1051 = vadd.f32 %v968, %v1050
    %1052 = vdwg.mxu0
    %vm1053 = vcmp.gt.f32.partialorder %v1043, 0.0
    %vm1054 = vcmp.gt.f32.partialorder %v1045, 0.0
    %vm1055 = vcmp.gt.f32.partialorder %v1049, 0.0
    %vm1056 = vcmp.gt.f32.partialorder %v1051, 0.0
    %v1057 = vmul.f32 %v1043, 0.01
    %v1058 = vmul.f32 %v1045, 0.01
    %v1059 = vmul.f32 %v1049, 0.01
    %v1060 = vmul.f32 %v1051, 0.01
    %v1061 = vsel %vm1053, %v1043, %v1057
    %v1062 = vsel %vm1054, %v1045, %v1058
    %v1063 = vsel %vm1055, %v1049, %v1059
    %v1064 = vsel %vm1056, %v1051, %v1060
    %1067 = vrot.lane.b32.xlu0 %v1062, 1
    %v1068 = vpop.permute.xlu0 %1067
    %1069 = vrot.lane.b32.xlu0 %v1064, 1
    %v1070 = vpop.permute.xlu0 %1069
    %1075 = vrot.lane.b32.xlu0 %v1061, 1
    %v1076 = vpop.permute.xlu0 %1075
    %1077 = vrot.lane.b32.xlu0 %v1063, 1
    %v1078 = vpop.permute.xlu0 %1077
    %v1079 = vsel %vm928, %v1076, %v1068
    %v1080 = vsel %vm928, %v1078, %v1070
    %v1085 = vsel %vm928, %v1068, %v1076
    %v1086 = vsel %vm928, %v1070, %v1078
    %v1087 = vsel %vm910, %v1085, 0.0
    %v1088 = vsel %vm911, %v1079, 0.0
    %v1089 = vsel %vm910, %v1086, 0.0
    %v1090 = vsel %vm911, %v1080, 0.0
    %1091 = vrot.lane.b32.xlu0 %v1061, 127
    %v1092 = vpop.permute.xlu0 %1091
    %1093 = vrot.lane.b32.xlu0 %v1062, 127
    %v1094 = vpop.permute.xlu0 %1093
    %1095 = vrot.lane.b32.xlu0 %v1063, 127
    %v1096 = vpop.permute.xlu0 %1095
    %1097 = vrot.lane.b32.xlu0 %v1064, 127
    %v1098 = vpop.permute.xlu0 %1097
    %v1099 = vsel %vm685, %v1092, %v1094
    %v1100 = vsel %vm685, %v1096, %v1098
    %v1107 = vsel %vm685, %v1094, %v1092
    %v1108 = vsel %vm685, %v1098, %v1096
    %v1109 = vsel %vm912, %v1099, 0.0
    %v1110 = vsel %vm913, %v1107, 0.0
    %v1111 = vsel %vm912, %v1100, 0.0
    %v1112 = vsel %vm913, %v1108, 0.0
    %v1113 = vld [vmem:[%s9] sm:$0x3f]
    %v1114 = vld [vmem:[%s10] sm:$0x3f]
    %v1115 = vld [vmem:[%s10 + $0x8] sm:$0x3f]
    %v1117 = vsel %vm969, %v1113, 0
    %1119 = vmatprep.subr.mxu0 %v1088
    %1120 = vmatpush1.msra.mxu0 %v1087
    %1121 = vmatprep.subr.mxu0 %v1090
    %1122 = vmatpush1.msra.mxu0 %v1089
    %1123 = vmatprep.subr.mxu0 %v1062
    %1124 = vmatpush1.msra.mxu0 %v1061
    %1125 = vmatprep.subr.mxu0 %v1064
    %1126 = vmatpush1.msra.mxu0 %v1063
    %1127 = vmatprep.subr.mxu0 %v1110
    %1128 = vmatpush1.msra.mxu0 %v1109
    %1129 = vmatprep.subr.mxu0 %v1112
    %1130 = vmatpush1.msra.mxu0 %v1111
    %1131 = vmatprep.subr.mxu0 0.0
    %1132 = vmatpush1.msra.mxu0 0.0
    %1133 = vmatprep.subr.mxu0 0.0
    %1134 = vmatpush1.msra.mxu0 0.0
    %1135 = vmatprep.subr.mxu0 0.0
    %1136 = vmatpush1.msra.mxu0 0.0
    %1137 = vmatprep.subr.mxu0 0.0
    %1138 = vmatpush1.msra.mxu0 0.0
    %1139 = vmatprep.subr.mxu0 0.0
    %1140 = vmatpush1.msra.mxu0 0.0
    %1141 = vmatprep.subr.mxu0 0.0
    %1142 = vmatpush1.msra.mxu0 0.0
    %1143 = vmatprep.subr.mxu0 0.0
    %1144 = vmatpush1.msra.mxu0 0.0
    %1145 = vmatprep.subr.mxu0 0.0
    %1146 = vmatpush1.msra.mxu0 0.0
    %1147 = vmatprep.subr.mxu0 0.0
    %1148 = vmatpush1.msra.mxu0 0.0
    %1149 = vmatprep.subr.mxu0 0.0
    %1150 = vmatpush1.msra.mxu0 0.0
    %1151 = vmatprep.subr.mxu0 0.0
    %1152 = vmatpush1.msra.mxu0 0.0
    %1153 = vmatprep.subr.mxu0 0.0
    %1154 = vmatpush1.msra.mxu0 0.0
    %1155 = vmatprep.subr.mxu0 0.0
    %1156 = vmatpush1.msra.mxu0 0.0
    %1157 = vmatprep.subr.mxu0 0.0
    %1158 = vmatpush1.msra.mxu0 0.0
    %1159 = vmatprep.subr.mxu0 0.0
    %1160 = vmatpush1.msra.mxu0 0.0
    %1161 = vmatprep.subr.mxu0 0.0
    %1162 = vmatpush1.msra.mxu0 0.0
    %1163 = vmatprep.subr.mxu0 0.0
    %1164 = vmatpush1.msra.mxu0 0.0
    %1165 = vmatprep.subr.mxu0 0.0
    %1166 = vmatpush1.msra.mxu0 0.0
    %1167 = vmatprep.subr.mxu0 0.0
    %1168 = vmatpush1.msra.mxu0 0.0
    %1169 = vmatprep.subr.mxu0 0.0
    %1170 = vmatpush1.msra.mxu0 0.0
    %1171 = vmatprep.subr.mxu0 0.0
    %1172 = vmatpush1.msra.mxu0 0.0
    %1173 = vmatprep.subr.mxu0 0.0
    %1174 = vmatpush1.msra.mxu0 0.0
    %1175 = vmatprep.subr.mxu0 0.0
    %1176 = vmatpush1.msra.mxu0 0.0
    %1177 = vmatprep.subr.mxu0 0.0
    %1178 = vmatpush1.msra.mxu0 0.0
    %1179 = vmatprep.subr.mxu0 0.0
    %1180 = vmatpush1.msra.mxu0 0.0
    %1181 = vmatprep.subr.mxu0 0.0
    %1182 = vmatpush1.msra.mxu0 0.0
    %1183 = vmatprep.mubr.f32.mxu0 0.0
    %1184 = vmatmul.mubr.f32.gmra.mrb[0].mxu0 %v1117
    %v1185 = vpop.f32.mrb[0].mxu0
    %v1186 = vadd.f32 %v1114, %v1185
    %v1187 = vpop.f32.mrb[0].mxu0
    %v1188 = vadd.f32 %v1115, %v1187
    %1189 = vdwg.mxu0
    %1190 = vst [vmem:[%s11] sm:$0x3f] %v1186
    %s1191 = scalar_lea.vmem %s11, 8
    %1192 = vst [vmem:[%s1191] sm:$0x3f] %v1188
    // Predicated region
    $region50: #{decoder_forward.1} parent=1 // pred_check
      _
    $region51: #{decoder_forward.1} parent=1 // pred_check_branch
      %1194 = sbr.rel (0) target = $region53
    $region52: #{decoder_forward.1} parent=1 // pred_region
      _
    $region53: #{decoder_forward.1} parent=1 // pred_fallthru
      _
    // Predicated region
    $region54: #{decoder_forward.1} parent=1 // pred_check
      _
    $region55: #{decoder_forward.1} parent=1 // pred_check_branch
      %1196 = sbr.rel (0) target = $region57
    $region56: #{decoder_forward.1} parent=1 // pred_region
      _
    $region57: #{decoder_forward.1} parent=1 // pred_fallthru
      _
    %1197 = vsyncpa [#allocation3], 1

</llo_original>
